<compile_context>
chip_gen: v5e
topology: v5e:2x2
jax: 0.10.0
libtpu: 0.0.40
codegen_flags: <defaults>
</compile_context>

<pallas_src>
import functools

import jax
import jax.numpy as jnp
from jax.experimental import pallas as pl
from jax.experimental.pallas import tpu as pltpu

# ---- small synthetic ViT config (stands in for vit_*_patch16_224) ----
IMG = 32            # image size
PATCH = 16          # patch size (as in the reference)
IN_CHANS = 3
EMBED_DIM = 32      # scaled-down embed_dim
DEPTH = 2           # scaled-down depth
NUM_HEADS = 2
MLP_RATIO = 4
NUM_CLASSES = 10
BATCH = 2
LN_EPS = 1e-6

NP = (IMG // PATCH) ** 2            # number of patches (4)
T_REAL = NP + 1                     # real tokens: cls + patches (5)
T_PAD = 8                           # padded to sublane multiple
CPP = IN_CHANS * PATCH * PATCH      # flattened patch dim (768)


def _ln(x, g, b):
    mean = jnp.mean(x, axis=-1, keepdims=True)
    xc = x - mean
    var = jnp.mean(xc * xc, axis=-1, keepdims=True)
    return xc * jax.lax.rsqrt(var + LN_EPS) * g + b


# ------------------------------------------------------------------ kernel --

def vit_fused_kernel(patches_ref, base_ref, patch_w_ref,
                     ln1_g_ref, ln1_b_ref, qkv_w_ref, qkv_b_ref,
                     proj_w_ref, proj_b_ref, ln2_g_ref, ln2_b_ref,
                     fc1_w_ref, fc1_b_ref, fc2_w_ref, fc2_b_ref,
                     norm_g_ref, norm_b_ref, head_w_ref, head_b_ref,
                     feat_ref, logit_ref, *, depth, num_heads, t_real):
    """Whole ViTZoo forward for ONE batch element (grid over batch).

    patches_ref: (1, T_PAD, CPP)  row 0 (cls slot) and pad rows are zero.
    base_ref:    (T_PAD, D)       cls+pos[0] on row 0, pos+patch_bias on patch
                                  rows, zeros on pad rows.
    Block weights are stacked on a leading DEPTH axis.
    """
    T, D = base_ref.shape
    Dh = D // num_heads
    scale = 1.0 / float(Dh) ** 0.5

    # Patch embedding (Conv2d k=s=PATCH as one matmul); cls/pos/bias folded in.
    tok = jnp.dot(patches_ref[0].astype(jnp.float32), patch_w_ref[...],
                  preferred_element_type=jnp.float32) + base_ref[...]    # (T, D)

    # Mask padded key columns so real tokens never attend to padding.
    key_ids = jax.lax.broadcasted_iota(jnp.int32, (T, T), 1)
    key_mask = jnp.where(key_ids >= t_real, -1e30, 0.0).astype(jnp.float32)

    for d in range(depth):
        # ---------------- attention ----------------
        h = _ln(tok, ln1_g_ref[d], ln1_b_ref[d])
        qkv = jnp.dot(h, qkv_w_ref[d],
                      preferred_element_type=jnp.float32) + qkv_b_ref[d]  # (T, 3D)

        heads = []
        for hh in range(num_heads):
            q = qkv[:, hh * Dh:(hh + 1) * Dh]
            k = qkv[:, D + hh * Dh:D + (hh + 1) * Dh]
            v = qkv[:, 2 * D + hh * Dh:2 * D + (hh + 1) * Dh]
            s = jax.lax.dot_general(q, k, (((1,), (1,)), ((), ())),
                                    preferred_element_type=jnp.float32) * scale
            s = s + key_mask
            s = s - jnp.max(s, axis=-1, keepdims=True)
            e = jnp.exp(s)
            p = e * pl.reciprocal(jnp.sum(e, axis=-1, keepdims=True), approx=True)
            heads.append(jnp.dot(p, v, preferred_element_type=jnp.float32))

        attn = jnp.concatenate(heads, axis=-1)                            # (T, D)
        attn = jnp.dot(attn, proj_w_ref[d],
                       preferred_element_type=jnp.float32) + proj_b_ref[d]
        tok = tok + attn                                                  # residual 1

        # ---------------- MLP ----------------
        h2 = _ln(tok, ln2_g_ref[d], ln2_b_ref[d])
        m = jnp.dot(h2, fc1_w_ref[d],
                    preferred_element_type=jnp.float32) + fc1_b_ref[d]
        # TODO(synk): PyTorch nn.GELU defaults to exact erf GELU; tanh approx here.
        m = jax.nn.gelu(m, approximate=True)
        m = jnp.dot(m, fc2_w_ref[d],
                    preferred_element_type=jnp.float32) + fc2_b_ref[d]
        tok = tok + m                                                     # residual 2

    # Final norm, cls token, linear head.
    tok = _ln(tok, norm_g_ref[...], norm_b_ref[...])
    cls_out = tok[0:1, :]                                                 # (1, D)
    feat_ref[0] = cls_out.astype(feat_ref.dtype)
    logit_ref[0] = (jnp.dot(cls_out, head_w_ref[...],
                            preferred_element_type=jnp.float32)
                    + head_b_ref[...]).astype(logit_ref.dtype)


# --------------------------------------------------------------------- glue --

def _extract_patches(x):
    """NCHW -> (B, T_PAD, C*P*P); row 0 (cls slot) and pad rows are zero."""
    B, C, H, W = x.shape
    Hp, Wp = H // PATCH, W // PATCH
    p = x.reshape(B, C, Hp, PATCH, Wp, PATCH)
    p = p.transpose(0, 2, 4, 1, 3, 5).reshape(B, Hp * Wp, C * PATCH * PATCH)
    return jnp.pad(p, ((0, 0), (1, T_PAD - T_REAL), (0, 0)))


@functools.partial(jax.jit, static_argnames=("pen",))
def vit_zoo_forward(params, x, pen=False):
    """ViTZoo.forward with self.prompt is None (prompt_flag=False)."""
    B = x.shape[0]
    D = EMBED_DIM

    patches = _extract_patches(x)                                   # (B, T_PAD, CPP)

    # cls token + pos embed + patch-conv bias folded into one (T_PAD, D) "base".
    base = jnp.concatenate([
        params["cls"] + params["pos"][0:1],
        params["pos"][1:T_REAL] + params["patch_b"],
        jnp.zeros((T_PAD - T_REAL, D), jnp.float32)], axis=0)

    blk = params["blocks"]
    inputs = (patches, base, params["patch_w"],
              blk["ln1_g"], blk["ln1_b"], blk["qkv_w"], blk["qkv_b"],
              blk["proj_w"], blk["proj_b"], blk["ln2_g"], blk["ln2_b"],
              blk["fc1_w"], blk["fc1_b"], blk["fc2_w"], blk["fc2_b"],
              params["norm_g"], params["norm_b"],
              params["head_w"], params["head_b"])

    def _full(a):
        return pl.BlockSpec(a.shape, lambda b, _n=a.ndim: (0,) * _n)

    in_specs = [pl.BlockSpec((1, T_PAD, CPP), lambda b: (b, 0, 0))]
    in_specs += [_full(a) for a in inputs[1:]]

    kern = functools.partial(vit_fused_kernel, depth=DEPTH,
                             num_heads=NUM_HEADS, t_real=T_REAL)

    feats, logits = pl.pallas_call(
        kern,
        grid=(B,),
        in_specs=in_specs,
        out_specs=[pl.BlockSpec((1, 1, D), lambda b: (b, 0, 0)),
                   pl.BlockSpec((1, 1, NUM_CLASSES), lambda b: (b, 0, 0))],
        out_shape=[jax.ShapeDtypeStruct((B, 1, D), jnp.float32),
                   jax.ShapeDtypeStruct((B, 1, NUM_CLASSES), jnp.float32)],
        compiler_params=pltpu.CompilerParams(
            dimension_semantics=("parallel",)),
    )(*inputs)

    if pen:
        return feats[:, 0, :]          # penultimate features (out before self.last)
    return logits[:, 0, :]             # self.last(out)


def init_params(key):
    D = EMBED_DIM
    Dm = D * MLP_RATIO
    keys = jax.random.split(key, 8)
    kit = iter(keys)

    def nrm(shape):
        return jax.random.normal(next(kit), shape, jnp.float32) * 0.02

    # TODO(synk): patch_w assumes the flattened PyTorch conv weight in (C, ph, pw)
    # order, transposed to (in, out); pretrained timm checkpoint loading is not
    # exercised here.
    params = {
        "patch_w": nrm((CPP, D)),
        "patch_b": jnp.zeros((1, D), jnp.float32),
        "cls": nrm((1, D)),
        "pos": nrm((T_REAL, D)),
        "norm_g": jnp.ones((1, D), jnp.float32),
        "norm_b": jnp.zeros((1, D), jnp.float32),
        "head_w": nrm((D, NUM_CLASSES)),            # self.last, (in, out) layout
        "head_b": jnp.zeros((1, NUM_CLASSES), jnp.float32),
        "blocks": {                                  # stacked on leading DEPTH axis
            "ln1_g": jnp.ones((DEPTH, 1, D), jnp.float32),
            "ln1_b": jnp.zeros((DEPTH, 1, D), jnp.float32),
            "qkv_w": nrm((DEPTH, D, 3 * D)),         # fused qkv, (in, out) layout
            "qkv_b": jnp.zeros((DEPTH, 1, 3 * D), jnp.float32),
            "proj_w": nrm((DEPTH, D, D)),
            "proj_b": jnp.zeros((DEPTH, 1, D), jnp.float32),
            "ln2_g": jnp.ones((DEPTH, 1, D), jnp.float32),
            "ln2_b": jnp.zeros((DEPTH, 1, D), jnp.float32),
            "fc1_w": nrm((DEPTH, D, Dm)),
            "fc1_b": jnp.zeros((DEPTH, 1, Dm), jnp.float32),
            "fc2_w": nrm((DEPTH, Dm, D)),
            "fc2_b": jnp.zeros((DEPTH, 1, D), jnp.float32),
        },
    }
    return params


# TODO(synk): CodaPrompt / DualPrompt / L2P prompt branches (prompt_flag != False)
# and the kd_token / t_or_s teacher-student paths are not exercised.

if __name__ == "__main__":
    key = jax.random.PRNGKey(0)
    pkey, xkey = jax.random.split(key)
    params = init_params(pkey)
    x = jax.random.normal(xkey, (BATCH, IN_CHANS, IMG, IMG), jnp.float32)

    logits = vit_zoo_forward(params, x)
    logits = jax.block_until_ready(logits)
    assert logits.shape == (BATCH, NUM_CLASSES), logits.shape
    assert bool(jnp.all(jnp.isfinite(logits)))
    print("KERNEL_OK")
</pallas_src>

<mosaic_0001>
module attributes {stable_mosaic.version = 11 : i64} {
  func.func @vit_fused_kernel(%arg0: i32, %arg1: memref<1x8x768xf32, #tpu.memory_space<vmem>>, %arg2: memref<8x32xf32, #tpu.memory_space<vmem>>, %arg3: memref<768x32xf32, #tpu.memory_space<vmem>>, %arg4: memref<2x1x32xf32, #tpu.memory_space<vmem>>, %arg5: memref<2x1x32xf32, #tpu.memory_space<vmem>>, %arg6: memref<2x32x96xf32, #tpu.memory_space<vmem>>, %arg7: memref<2x1x96xf32, #tpu.memory_space<vmem>>, %arg8: memref<2x32x32xf32, #tpu.memory_space<vmem>>, %arg9: memref<2x1x32xf32, #tpu.memory_space<vmem>>, %arg10: memref<2x1x32xf32, #tpu.memory_space<vmem>>, %arg11: memref<2x1x32xf32, #tpu.memory_space<vmem>>, %arg12: memref<2x32x128xf32, #tpu.memory_space<vmem>>, %arg13: memref<2x1x128xf32, #tpu.memory_space<vmem>>, %arg14: memref<2x128x32xf32, #tpu.memory_space<vmem>>, %arg15: memref<2x1x32xf32, #tpu.memory_space<vmem>>, %arg16: memref<1x32xf32, #tpu.memory_space<vmem>>, %arg17: memref<1x32xf32, #tpu.memory_space<vmem>>, %arg18: memref<32x10xf32, #tpu.memory_space<vmem>>, %arg19: memref<1x10xf32, #tpu.memory_space<vmem>>, %arg20: memref<1x1x32xf32, #tpu.memory_space<vmem>>, %arg21: memref<1x1x10xf32, #tpu.memory_space<vmem>>) attributes {dimension_semantics = [#tpu.dimension_semantics<parallel>], iteration_bounds = array<i64: 2>, scalar_prefetch = 0 : i64, scratch_operands = 0 : i64, tpu.core_type = #tpu.core_type<tc>, window_params = [{transform_indices = @transform_0, window_bounds = array<i64: 1, 8, 768>}, {pipeline_mode = #tpu.pipeline_mode<synchronous>, transform_indices = @transform_1, window_bounds = array<i64: 8, 32>}, {pipeline_mode = #tpu.pipeline_mode<synchronous>, transform_indices = @transform_2, window_bounds = array<i64: 768, 32>}, {pipeline_mode = #tpu.pipeline_mode<synchronous>, transform_indices = @transform_3, window_bounds = array<i64: 2, 1, 32>}, {pipeline_mode = #tpu.pipeline_mode<synchronous>, transform_indices = @transform_4, window_bounds = array<i64: 2, 1, 32>}, {pipeline_mode = #tpu.pipeline_mode<synchronous>, transform_indices = @transform_5, window_bounds = array<i64: 2, 32, 96>}, {pipeline_mode = #tpu.pipeline_mode<synchronous>, transform_indices = @transform_6, window_bounds = array<i64: 2, 1, 96>}, {pipeline_mode = #tpu.pipeline_mode<synchronous>, transform_indices = @transform_7, window_bounds = array<i64: 2, 32, 32>}, {pipeline_mode = #tpu.pipeline_mode<synchronous>, transform_indices = @transform_8, window_bounds = array<i64: 2, 1, 32>}, {pipeline_mode = #tpu.pipeline_mode<synchronous>, transform_indices = @transform_9, window_bounds = array<i64: 2, 1, 32>}, {pipeline_mode = #tpu.pipeline_mode<synchronous>, transform_indices = @transform_10, window_bounds = array<i64: 2, 1, 32>}, {pipeline_mode = #tpu.pipeline_mode<synchronous>, transform_indices = @transform_11, window_bounds = array<i64: 2, 32, 128>}, {pipeline_mode = #tpu.pipeline_mode<synchronous>, transform_indices = @transform_12, window_bounds = array<i64: 2, 1, 128>}, {pipeline_mode = #tpu.pipeline_mode<synchronous>, transform_indices = @transform_13, window_bounds = array<i64: 2, 128, 32>}, {pipeline_mode = #tpu.pipeline_mode<synchronous>, transform_indices = @transform_14, window_bounds = array<i64: 2, 1, 32>}, {pipeline_mode = #tpu.pipeline_mode<synchronous>, transform_indices = @transform_15, window_bounds = array<i64: 1, 32>}, {pipeline_mode = #tpu.pipeline_mode<synchronous>, transform_indices = @transform_16, window_bounds = array<i64: 1, 32>}, {pipeline_mode = #tpu.pipeline_mode<synchronous>, transform_indices = @transform_17, window_bounds = array<i64: 32, 10>}, {pipeline_mode = #tpu.pipeline_mode<synchronous>, transform_indices = @transform_18, window_bounds = array<i64: 1, 10>}, {transform_indices = @transform_19, window_bounds = array<i64: 1, 1, 32>}, {transform_indices = @transform_20, window_bounds = array<i64: 1, 1, 10>}]} {
    %c0 = arith.constant 0 : index
    %c0_0 = arith.constant 0 : index
    %c0_1 = arith.constant 0 : index
    %0 = vector.load %arg1[%c0, %c0_0, %c0_1] : memref<1x8x768xf32, #tpu.memory_space<vmem>>, vector<1x8x768xf32>
    %1 = vector.shape_cast %0 : vector<1x8x768xf32> to vector<8x768xf32>
    %c0_2 = arith.constant 0 : index
    %c0_3 = arith.constant 0 : index
    %2 = vector.load %arg3[%c0_2, %c0_3] : memref<768x32xf32, #tpu.memory_space<vmem>>, vector<768x32xf32>
    %cst = arith.constant dense<0.000000e+00> : vector<8x32xf32>
    %3 = tpu.matmul %1, %2, %cst {dimension_numbers = #tpu.dot_dimension_numbers<[1], [0], [0], [1], [0, 0, 1, 1], [], []>} : vector<8x768xf32>, vector<768x32xf32>, vector<8x32xf32> -> vector<8x32xf32>
    %c0_4 = arith.constant 0 : index
    %c0_5 = arith.constant 0 : index
    %4 = vector.load %arg2[%c0_4, %c0_5] : memref<8x32xf32, #tpu.memory_space<vmem>>, vector<8x32xf32>
    %5 = arith.addf %3, %4 : vector<8x32xf32>
    %6 = tpu.iota {dimensions = array<i32: 1>} : vector<8x8xi32>
    %c5_i32 = arith.constant 5 : i32
    %7 = vector.broadcast %c5_i32 : i32 to vector<8x8xi32>
    %8 = arith.cmpi sge, %6, %7 : vector<8x8xi32>
    %cst_6 = arith.constant -1.000000e+30 : f32
    %cst_7 = arith.constant 0.000000e+00 : f32
    %9 = vector.broadcast %cst_6 : f32 to vector<8x8xf32>
    %10 = vector.broadcast %cst_7 : f32 to vector<8x8xf32>
    %11 = arith.select %8, %9, %10 : vector<8x8xi1>, vector<8x8xf32>
    %c0_8 = arith.constant 0 : index
    %c0_9 = arith.constant 0 : index
    %c0_10 = arith.constant 0 : index
    %12 = vector.load %arg4[%c0_8, %c0_9, %c0_10] : memref<2x1x32xf32, #tpu.memory_space<vmem>>, vector<1x1x32xf32>
    %13 = vector.shape_cast %12 : vector<1x1x32xf32> to vector<1x32xf32>
    %c0_11 = arith.constant 0 : index
    %c0_12 = arith.constant 0 : index
    %c0_13 = arith.constant 0 : index
    %14 = vector.load %arg5[%c0_11, %c0_12, %c0_13] : memref<2x1x32xf32, #tpu.memory_space<vmem>>, vector<1x1x32xf32>
    %15 = vector.shape_cast %14 : vector<1x1x32xf32> to vector<1x32xf32>
    %cst_14 = arith.constant dense<0.000000e+00> : vector<8xf32>
    %16 = vector.multi_reduction <add>, %5, %cst_14 [1] : vector<8x32xf32> to vector<8xf32>
    %17 = vector.shape_cast %16 : vector<8xf32> to vector<8x1xf32>
    %cst_15 = arith.constant 3.200000e+01 : f32
    %18 = vector.broadcast %cst_15 : f32 to vector<8x1xf32>
    %19 = arith.divf %17, %18 : vector<8x1xf32>
    %20 = vector.broadcast %19 : vector<8x1xf32> to vector<8x32xf32>
    %21 = arith.subf %5, %20 : vector<8x32xf32>
    %22 = arith.mulf %21, %21 : vector<8x32xf32>
    %cst_16 = arith.constant dense<0.000000e+00> : vector<8xf32>
    %23 = vector.multi_reduction <add>, %22, %cst_16 [1] : vector<8x32xf32> to vector<8xf32>
    %24 = vector.shape_cast %23 : vector<8xf32> to vector<8x1xf32>
    %cst_17 = arith.constant 3.200000e+01 : f32
    %25 = vector.broadcast %cst_17 : f32 to vector<8x1xf32>
    %26 = arith.divf %24, %25 : vector<8x1xf32>
    %cst_18 = arith.constant 9.99999997E-7 : f32
    %27 = vector.broadcast %cst_18 : f32 to vector<8x1xf32>
    %28 = arith.addf %26, %27 : vector<8x1xf32>
    %29 = math.rsqrt %28 : vector<8x1xf32>
    %30 = vector.broadcast %29 : vector<8x1xf32> to vector<8x32xf32>
    %31 = arith.mulf %21, %30 : vector<8x32xf32>
    %32 = vector.broadcast %13 : vector<1x32xf32> to vector<8x32xf32>
    %33 = arith.mulf %31, %32 : vector<8x32xf32>
    %34 = vector.broadcast %15 : vector<1x32xf32> to vector<8x32xf32>
    %35 = arith.addf %33, %34 : vector<8x32xf32>
    %c0_19 = arith.constant 0 : index
    %c0_20 = arith.constant 0 : index
    %c0_21 = arith.constant 0 : index
    %36 = vector.load %arg6[%c0_19, %c0_20, %c0_21] : memref<2x32x96xf32, #tpu.memory_space<vmem>>, vector<1x32x96xf32>
    %37 = vector.shape_cast %36 : vector<1x32x96xf32> to vector<32x96xf32>
    %cst_22 = arith.constant dense<0.000000e+00> : vector<8x96xf32>
    %38 = tpu.matmul %35, %37, %cst_22 {dimension_numbers = #tpu.dot_dimension_numbers<[1], [0], [0], [1], [0, 0, 1, 1], [], []>} : vector<8x32xf32>, vector<32x96xf32>, vector<8x96xf32> -> vector<8x96xf32>
    %c0_23 = arith.constant 0 : index
    %c0_24 = arith.constant 0 : index
    %c0_25 = arith.constant 0 : index
    %39 = vector.load %arg7[%c0_23, %c0_24, %c0_25] : memref<2x1x96xf32, #tpu.memory_space<vmem>>, vector<1x1x96xf32>
    %40 = vector.shape_cast %39 : vector<1x1x96xf32> to vector<1x96xf32>
    %41 = vector.broadcast %40 : vector<1x96xf32> to vector<8x96xf32>
    %42 = arith.addf %38, %41 : vector<8x96xf32>
    %43 = vector.extract_strided_slice %42 {offsets = [0, 0], sizes = [8, 16], strides = [1, 1]} : vector<8x96xf32> to vector<8x16xf32>
    %44 = vector.extract_strided_slice %42 {offsets = [0, 32], sizes = [8, 16], strides = [1, 1]} : vector<8x96xf32> to vector<8x16xf32>
    %45 = vector.extract_strided_slice %42 {offsets = [0, 64], sizes = [8, 16], strides = [1, 1]} : vector<8x96xf32> to vector<8x16xf32>
    %cst_26 = arith.constant dense<0.000000e+00> : vector<8x8xf32>
    %46 = tpu.matmul %43, %44, %cst_26 {dimension_numbers = #tpu.dot_dimension_numbers<[1], [1], [0], [0], [0, 0, 1, 0], [], []>} : vector<8x16xf32>, vector<8x16xf32>, vector<8x8xf32> -> vector<8x8xf32>
    %cst_27 = arith.constant 2.500000e-01 : f32
    %47 = vector.broadcast %cst_27 : f32 to vector<8x8xf32>
    %48 = arith.mulf %46, %47 : vector<8x8xf32>
    %49 = arith.addf %48, %11 : vector<8x8xf32>
    %cst_28 = arith.constant dense<0xFF800000> : vector<8xf32>
    %50 = vector.multi_reduction <maximumf>, %49, %cst_28 [1] : vector<8x8xf32> to vector<8xf32>
    %51 = vector.shape_cast %50 : vector<8xf32> to vector<8x1xf32>
    %52 = vector.broadcast %51 : vector<8x1xf32> to vector<8x8xf32>
    %53 = arith.subf %49, %52 : vector<8x8xf32>
    %54 = math.exp %53 : vector<8x8xf32>
    %cst_29 = arith.constant dense<0.000000e+00> : vector<8xf32>
    %55 = vector.multi_reduction <add>, %54, %cst_29 [1] : vector<8x8xf32> to vector<8xf32>
    %56 = vector.shape_cast %55 : vector<8xf32> to vector<8x1xf32>
    %57 = tpu.reciprocal %56 {approx = true} : vector<8x1xf32> -> vector<8x1xf32>
    %58 = vector.broadcast %57 : vector<8x1xf32> to vector<8x8xf32>
    %59 = arith.mulf %54, %58 : vector<8x8xf32>
    %cst_30 = arith.constant dense<0.000000e+00> : vector<8x16xf32>
    %60 = tpu.matmul %59, %45, %cst_30 {dimension_numbers = #tpu.dot_dimension_numbers<[1], [0], [0], [1], [0, 0, 1, 1], [], []>} : vector<8x8xf32>, vector<8x16xf32>, vector<8x16xf32> -> vector<8x16xf32>
    %61 = vector.extract_strided_slice %42 {offsets = [0, 16], sizes = [8, 16], strides = [1, 1]} : vector<8x96xf32> to vector<8x16xf32>
    %62 = vector.extract_strided_slice %42 {offsets = [0, 48], sizes = [8, 16], strides = [1, 1]} : vector<8x96xf32> to vector<8x16xf32>
    %63 = vector.extract_strided_slice %42 {offsets = [0, 80], sizes = [8, 16], strides = [1, 1]} : vector<8x96xf32> to vector<8x16xf32>
    %cst_31 = arith.constant dense<0.000000e+00> : vector<8x8xf32>
    %64 = tpu.matmul %61, %62, %cst_31 {dimension_numbers = #tpu.dot_dimension_numbers<[1], [1], [0], [0], [0, 0, 1, 0], [], []>} : vector<8x16xf32>, vector<8x16xf32>, vector<8x8xf32> -> vector<8x8xf32>
    %cst_32 = arith.constant 2.500000e-01 : f32
    %65 = vector.broadcast %cst_32 : f32 to vector<8x8xf32>
    %66 = arith.mulf %64, %65 : vector<8x8xf32>
    %67 = arith.addf %66, %11 : vector<8x8xf32>
    %cst_33 = arith.constant dense<0xFF800000> : vector<8xf32>
    %68 = vector.multi_reduction <maximumf>, %67, %cst_33 [1] : vector<8x8xf32> to vector<8xf32>
    %69 = vector.shape_cast %68 : vector<8xf32> to vector<8x1xf32>
    %70 = vector.broadcast %69 : vector<8x1xf32> to vector<8x8xf32>
    %71 = arith.subf %67, %70 : vector<8x8xf32>
    %72 = math.exp %71 : vector<8x8xf32>
    %cst_34 = arith.constant dense<0.000000e+00> : vector<8xf32>
    %73 = vector.multi_reduction <add>, %72, %cst_34 [1] : vector<8x8xf32> to vector<8xf32>
    %74 = vector.shape_cast %73 : vector<8xf32> to vector<8x1xf32>
    %75 = tpu.reciprocal %74 {approx = true} : vector<8x1xf32> -> vector<8x1xf32>
    %76 = vector.broadcast %75 : vector<8x1xf32> to vector<8x8xf32>
    %77 = arith.mulf %72, %76 : vector<8x8xf32>
    %cst_35 = arith.constant dense<0.000000e+00> : vector<8x16xf32>
    %78 = tpu.matmul %77, %63, %cst_35 {dimension_numbers = #tpu.dot_dimension_numbers<[1], [0], [0], [1], [0, 0, 1, 1], [], []>} : vector<8x8xf32>, vector<8x16xf32>, vector<8x16xf32> -> vector<8x16xf32>
    %79 = tpu.concatenate %60, %78 in 1 : vector<8x16xf32>, vector<8x16xf32> -> vector<8x32xf32>
    %c0_36 = arith.constant 0 : index
    %c0_37 = arith.constant 0 : index
    %c0_38 = arith.constant 0 : index
    %80 = vector.load %arg8[%c0_36, %c0_37, %c0_38] : memref<2x32x32xf32, #tpu.memory_space<vmem>>, vector<1x32x32xf32>
    %81 = vector.shape_cast %80 : vector<1x32x32xf32> to vector<32x32xf32>
    %cst_39 = arith.constant dense<0.000000e+00> : vector<8x32xf32>
    %82 = tpu.matmul %79, %81, %cst_39 {dimension_numbers = #tpu.dot_dimension_numbers<[1], [0], [0], [1], [0, 0, 1, 1], [], []>} : vector<8x32xf32>, vector<32x32xf32>, vector<8x32xf32> -> vector<8x32xf32>
    %c0_40 = arith.constant 0 : index
    %c0_41 = arith.constant 0 : index
    %c0_42 = arith.constant 0 : index
    %83 = vector.load %arg9[%c0_40, %c0_41, %c0_42] : memref<2x1x32xf32, #tpu.memory_space<vmem>>, vector<1x1x32xf32>
    %84 = vector.shape_cast %83 : vector<1x1x32xf32> to vector<1x32xf32>
    %85 = vector.broadcast %84 : vector<1x32xf32> to vector<8x32xf32>
    %86 = arith.addf %82, %85 : vector<8x32xf32>
    %87 = arith.addf %5, %86 : vector<8x32xf32>
    %c0_43 = arith.constant 0 : index
    %c0_44 = arith.constant 0 : index
    %c0_45 = arith.constant 0 : index
    %88 = vector.load %arg10[%c0_43, %c0_44, %c0_45] : memref<2x1x32xf32, #tpu.memory_space<vmem>>, vector<1x1x32xf32>
    %89 = vector.shape_cast %88 : vector<1x1x32xf32> to vector<1x32xf32>
    %c0_46 = arith.constant 0 : index
    %c0_47 = arith.constant 0 : index
    %c0_48 = arith.constant 0 : index
    %90 = vector.load %arg11[%c0_46, %c0_47, %c0_48] : memref<2x1x32xf32, #tpu.memory_space<vmem>>, vector<1x1x32xf32>
    %91 = vector.shape_cast %90 : vector<1x1x32xf32> to vector<1x32xf32>
    %cst_49 = arith.constant dense<0.000000e+00> : vector<8xf32>
    %92 = vector.multi_reduction <add>, %87, %cst_49 [1] : vector<8x32xf32> to vector<8xf32>
    %93 = vector.shape_cast %92 : vector<8xf32> to vector<8x1xf32>
    %cst_50 = arith.constant 3.200000e+01 : f32
    %94 = vector.broadcast %cst_50 : f32 to vector<8x1xf32>
    %95 = arith.divf %93, %94 : vector<8x1xf32>
    %96 = vector.broadcast %95 : vector<8x1xf32> to vector<8x32xf32>
    %97 = arith.subf %87, %96 : vector<8x32xf32>
    %98 = arith.mulf %97, %97 : vector<8x32xf32>
    %cst_51 = arith.constant dense<0.000000e+00> : vector<8xf32>
    %99 = vector.multi_reduction <add>, %98, %cst_51 [1] : vector<8x32xf32> to vector<8xf32>
    %100 = vector.shape_cast %99 : vector<8xf32> to vector<8x1xf32>
    %cst_52 = arith.constant 3.200000e+01 : f32
    %101 = vector.broadcast %cst_52 : f32 to vector<8x1xf32>
    %102 = arith.divf %100, %101 : vector<8x1xf32>
    %cst_53 = arith.constant 9.99999997E-7 : f32
    %103 = vector.broadcast %cst_53 : f32 to vector<8x1xf32>
    %104 = arith.addf %102, %103 : vector<8x1xf32>
    %105 = math.rsqrt %104 : vector<8x1xf32>
    %106 = vector.broadcast %105 : vector<8x1xf32> to vector<8x32xf32>
    %107 = arith.mulf %97, %106 : vector<8x32xf32>
    %108 = vector.broadcast %89 : vector<1x32xf32> to vector<8x32xf32>
    %109 = arith.mulf %107, %108 : vector<8x32xf32>
    %110 = vector.broadcast %91 : vector<1x32xf32> to vector<8x32xf32>
    %111 = arith.addf %109, %110 : vector<8x32xf32>
    %c0_54 = arith.constant 0 : index
    %c0_55 = arith.constant 0 : index
    %c0_56 = arith.constant 0 : index
    %112 = vector.load %arg12[%c0_54, %c0_55, %c0_56] : memref<2x32x128xf32, #tpu.memory_space<vmem>>, vector<1x32x128xf32>
    %113 = vector.shape_cast %112 : vector<1x32x128xf32> to vector<32x128xf32>
    %cst_57 = arith.constant dense<0.000000e+00> : vector<8x128xf32>
    %114 = tpu.matmul %111, %113, %cst_57 {dimension_numbers = #tpu.dot_dimension_numbers<[1], [0], [0], [1], [0, 0, 1, 1], [], []>} : vector<8x32xf32>, vector<32x128xf32>, vector<8x128xf32> -> vector<8x128xf32>
    %c0_58 = arith.constant 0 : index
    %c0_59 = arith.constant 0 : index
    %c0_60 = arith.constant 0 : index
    %115 = vector.load %arg13[%c0_58, %c0_59, %c0_60] : memref<2x1x128xf32, #tpu.memory_space<vmem>>, vector<1x1x128xf32>
    %116 = vector.shape_cast %115 : vector<1x1x128xf32> to vector<1x128xf32>
    %117 = vector.broadcast %116 : vector<1x128xf32> to vector<8x128xf32>
    %118 = arith.addf %114, %117 : vector<8x128xf32>
    %119 = arith.mulf %118, %118 : vector<8x128xf32>
    %120 = arith.mulf %118, %119 : vector<8x128xf32>
    %cst_61 = arith.constant 4.471500e-02 : f32
    %121 = vector.broadcast %cst_61 : f32 to vector<8x128xf32>
    %122 = arith.mulf %121, %120 : vector<8x128xf32>
    %123 = arith.addf %118, %122 : vector<8x128xf32>
    %cst_62 = arith.constant 0.797884583 : f32
    %124 = vector.broadcast %cst_62 : f32 to vector<8x128xf32>
    %125 = arith.mulf %124, %123 : vector<8x128xf32>
    %126 = math.tanh %125 : vector<8x128xf32>
    %cst_63 = arith.constant 1.000000e+00 : f32
    %127 = vector.broadcast %cst_63 : f32 to vector<8x128xf32>
    %128 = arith.addf %127, %126 : vector<8x128xf32>
    %cst_64 = arith.constant 5.000000e-01 : f32
    %129 = vector.broadcast %cst_64 : f32 to vector<8x128xf32>
    %130 = arith.mulf %129, %128 : vector<8x128xf32>
    %131 = arith.mulf %118, %130 : vector<8x128xf32>
    %c0_65 = arith.constant 0 : index
    %c0_66 = arith.constant 0 : index
    %c0_67 = arith.constant 0 : index
    %132 = vector.load %arg14[%c0_65, %c0_66, %c0_67] : memref<2x128x32xf32, #tpu.memory_space<vmem>>, vector<1x128x32xf32>
    %133 = vector.shape_cast %132 : vector<1x128x32xf32> to vector<128x32xf32>
    %cst_68 = arith.constant dense<0.000000e+00> : vector<8x32xf32>
    %134 = tpu.matmul %131, %133, %cst_68 {dimension_numbers = #tpu.dot_dimension_numbers<[1], [0], [0], [1], [0, 0, 1, 1], [], []>} : vector<8x128xf32>, vector<128x32xf32>, vector<8x32xf32> -> vector<8x32xf32>
    %c0_69 = arith.constant 0 : index
    %c0_70 = arith.constant 0 : index
    %c0_71 = arith.constant 0 : index
    %135 = vector.load %arg15[%c0_69, %c0_70, %c0_71] : memref<2x1x32xf32, #tpu.memory_space<vmem>>, vector<1x1x32xf32>
    %136 = vector.shape_cast %135 : vector<1x1x32xf32> to vector<1x32xf32>
    %137 = vector.broadcast %136 : vector<1x32xf32> to vector<8x32xf32>
    %138 = arith.addf %134, %137 : vector<8x32xf32>
    %139 = arith.addf %87, %138 : vector<8x32xf32>
    %c1 = arith.constant 1 : index
    %c0_72 = arith.constant 0 : index
    %c0_73 = arith.constant 0 : index
    %140 = vector.load %arg4[%c1, %c0_72, %c0_73] : memref<2x1x32xf32, #tpu.memory_space<vmem>>, vector<1x1x32xf32>
    %141 = vector.shape_cast %140 : vector<1x1x32xf32> to vector<1x32xf32>
    %c1_74 = arith.constant 1 : index
    %c0_75 = arith.constant 0 : index
    %c0_76 = arith.constant 0 : index
    %142 = vector.load %arg5[%c1_74, %c0_75, %c0_76] : memref<2x1x32xf32, #tpu.memory_space<vmem>>, vector<1x1x32xf32>
    %143 = vector.shape_cast %142 : vector<1x1x32xf32> to vector<1x32xf32>
    %cst_77 = arith.constant dense<0.000000e+00> : vector<8xf32>
    %144 = vector.multi_reduction <add>, %139, %cst_77 [1] : vector<8x32xf32> to vector<8xf32>
    %145 = vector.shape_cast %144 : vector<8xf32> to vector<8x1xf32>
    %cst_78 = arith.constant 3.200000e+01 : f32
    %146 = vector.broadcast %cst_78 : f32 to vector<8x1xf32>
    %147 = arith.divf %145, %146 : vector<8x1xf32>
    %148 = vector.broadcast %147 : vector<8x1xf32> to vector<8x32xf32>
    %149 = arith.subf %139, %148 : vector<8x32xf32>
    %150 = arith.mulf %149, %149 : vector<8x32xf32>
    %cst_79 = arith.constant dense<0.000000e+00> : vector<8xf32>
    %151 = vector.multi_reduction <add>, %150, %cst_79 [1] : vector<8x32xf32> to vector<8xf32>
    %152 = vector.shape_cast %151 : vector<8xf32> to vector<8x1xf32>
    %cst_80 = arith.constant 3.200000e+01 : f32
    %153 = vector.broadcast %cst_80 : f32 to vector<8x1xf32>
    %154 = arith.divf %152, %153 : vector<8x1xf32>
    %cst_81 = arith.constant 9.99999997E-7 : f32
    %155 = vector.broadcast %cst_81 : f32 to vector<8x1xf32>
    %156 = arith.addf %154, %155 : vector<8x1xf32>
    %157 = math.rsqrt %156 : vector<8x1xf32>
    %158 = vector.broadcast %157 : vector<8x1xf32> to vector<8x32xf32>
    %159 = arith.mulf %149, %158 : vector<8x32xf32>
    %160 = vector.broadcast %141 : vector<1x32xf32> to vector<8x32xf32>
    %161 = arith.mulf %159, %160 : vector<8x32xf32>
    %162 = vector.broadcast %143 : vector<1x32xf32> to vector<8x32xf32>
    %163 = arith.addf %161, %162 : vector<8x32xf32>
    %c1_82 = arith.constant 1 : index
    %c0_83 = arith.constant 0 : index
    %c0_84 = arith.constant 0 : index
    %164 = vector.load %arg6[%c1_82, %c0_83, %c0_84] : memref<2x32x96xf32, #tpu.memory_space<vmem>>, vector<1x32x96xf32>
    %165 = vector.shape_cast %164 : vector<1x32x96xf32> to vector<32x96xf32>
    %cst_85 = arith.constant dense<0.000000e+00> : vector<8x96xf32>
    %166 = tpu.matmul %163, %165, %cst_85 {dimension_numbers = #tpu.dot_dimension_numbers<[1], [0], [0], [1], [0, 0, 1, 1], [], []>} : vector<8x32xf32>, vector<32x96xf32>, vector<8x96xf32> -> vector<8x96xf32>
    %c1_86 = arith.constant 1 : index
    %c0_87 = arith.constant 0 : index
    %c0_88 = arith.constant 0 : index
    %167 = vector.load %arg7[%c1_86, %c0_87, %c0_88] : memref<2x1x96xf32, #tpu.memory_space<vmem>>, vector<1x1x96xf32>
    %168 = vector.shape_cast %167 : vector<1x1x96xf32> to vector<1x96xf32>
    %169 = vector.broadcast %168 : vector<1x96xf32> to vector<8x96xf32>
    %170 = arith.addf %166, %169 : vector<8x96xf32>
    %171 = vector.extract_strided_slice %170 {offsets = [0, 0], sizes = [8, 16], strides = [1, 1]} : vector<8x96xf32> to vector<8x16xf32>
    %172 = vector.extract_strided_slice %170 {offsets = [0, 32], sizes = [8, 16], strides = [1, 1]} : vector<8x96xf32> to vector<8x16xf32>
    %173 = vector.extract_strided_slice %170 {offsets = [0, 64], sizes = [8, 16], strides = [1, 1]} : vector<8x96xf32> to vector<8x16xf32>
    %cst_89 = arith.constant dense<0.000000e+00> : vector<8x8xf32>
    %174 = tpu.matmul %171, %172, %cst_89 {dimension_numbers = #tpu.dot_dimension_numbers<[1], [1], [0], [0], [0, 0, 1, 0], [], []>} : vector<8x16xf32>, vector<8x16xf32>, vector<8x8xf32> -> vector<8x8xf32>
    %cst_90 = arith.constant 2.500000e-01 : f32
    %175 = vector.broadcast %cst_90 : f32 to vector<8x8xf32>
    %176 = arith.mulf %174, %175 : vector<8x8xf32>
    %177 = arith.addf %176, %11 : vector<8x8xf32>
    %cst_91 = arith.constant dense<0xFF800000> : vector<8xf32>
    %178 = vector.multi_reduction <maximumf>, %177, %cst_91 [1] : vector<8x8xf32> to vector<8xf32>
    %179 = vector.shape_cast %178 : vector<8xf32> to vector<8x1xf32>
    %180 = vector.broadcast %179 : vector<8x1xf32> to vector<8x8xf32>
    %181 = arith.subf %177, %180 : vector<8x8xf32>
    %182 = math.exp %181 : vector<8x8xf32>
    %cst_92 = arith.constant dense<0.000000e+00> : vector<8xf32>
    %183 = vector.multi_reduction <add>, %182, %cst_92 [1] : vector<8x8xf32> to vector<8xf32>
    %184 = vector.shape_cast %183 : vector<8xf32> to vector<8x1xf32>
    %185 = tpu.reciprocal %184 {approx = true} : vector<8x1xf32> -> vector<8x1xf32>
    %186 = vector.broadcast %185 : vector<8x1xf32> to vector<8x8xf32>
    %187 = arith.mulf %182, %186 : vector<8x8xf32>
    %cst_93 = arith.constant dense<0.000000e+00> : vector<8x16xf32>
    %188 = tpu.matmul %187, %173, %cst_93 {dimension_numbers = #tpu.dot_dimension_numbers<[1], [0], [0], [1], [0, 0, 1, 1], [], []>} : vector<8x8xf32>, vector<8x16xf32>, vector<8x16xf32> -> vector<8x16xf32>
    %189 = vector.extract_strided_slice %170 {offsets = [0, 16], sizes = [8, 16], strides = [1, 1]} : vector<8x96xf32> to vector<8x16xf32>
    %190 = vector.extract_strided_slice %170 {offsets = [0, 48], sizes = [8, 16], strides = [1, 1]} : vector<8x96xf32> to vector<8x16xf32>
    %191 = vector.extract_strided_slice %170 {offsets = [0, 80], sizes = [8, 16], strides = [1, 1]} : vector<8x96xf32> to vector<8x16xf32>
    %cst_94 = arith.constant dense<0.000000e+00> : vector<8x8xf32>
    %192 = tpu.matmul %189, %190, %cst_94 {dimension_numbers = #tpu.dot_dimension_numbers<[1], [1], [0], [0], [0, 0, 1, 0], [], []>} : vector<8x16xf32>, vector<8x16xf32>, vector<8x8xf32> -> vector<8x8xf32>
    %cst_95 = arith.constant 2.500000e-01 : f32
    %193 = vector.broadcast %cst_95 : f32 to vector<8x8xf32>
    %194 = arith.mulf %192, %193 : vector<8x8xf32>
    %195 = arith.addf %194, %11 : vector<8x8xf32>
    %cst_96 = arith.constant dense<0xFF800000> : vector<8xf32>
    %196 = vector.multi_reduction <maximumf>, %195, %cst_96 [1] : vector<8x8xf32> to vector<8xf32>
    %197 = vector.shape_cast %196 : vector<8xf32> to vector<8x1xf32>
    %198 = vector.broadcast %197 : vector<8x1xf32> to vector<8x8xf32>
    %199 = arith.subf %195, %198 : vector<8x8xf32>
    %200 = math.exp %199 : vector<8x8xf32>
    %cst_97 = arith.constant dense<0.000000e+00> : vector<8xf32>
    %201 = vector.multi_reduction <add>, %200, %cst_97 [1] : vector<8x8xf32> to vector<8xf32>
    %202 = vector.shape_cast %201 : vector<8xf32> to vector<8x1xf32>
    %203 = tpu.reciprocal %202 {approx = true} : vector<8x1xf32> -> vector<8x1xf32>
    %204 = vector.broadcast %203 : vector<8x1xf32> to vector<8x8xf32>
    %205 = arith.mulf %200, %204 : vector<8x8xf32>
    %cst_98 = arith.constant dense<0.000000e+00> : vector<8x16xf32>
    %206 = tpu.matmul %205, %191, %cst_98 {dimension_numbers = #tpu.dot_dimension_numbers<[1], [0], [0], [1], [0, 0, 1, 1], [], []>} : vector<8x8xf32>, vector<8x16xf32>, vector<8x16xf32> -> vector<8x16xf32>
    %207 = tpu.concatenate %188, %206 in 1 : vector<8x16xf32>, vector<8x16xf32> -> vector<8x32xf32>
    %c1_99 = arith.constant 1 : index
    %c0_100 = arith.constant 0 : index
    %c0_101 = arith.constant 0 : index
    %208 = vector.load %arg8[%c1_99, %c0_100, %c0_101] : memref<2x32x32xf32, #tpu.memory_space<vmem>>, vector<1x32x32xf32>
    %209 = vector.shape_cast %208 : vector<1x32x32xf32> to vector<32x32xf32>
    %cst_102 = arith.constant dense<0.000000e+00> : vector<8x32xf32>
    %210 = tpu.matmul %207, %209, %cst_102 {dimension_numbers = #tpu.dot_dimension_numbers<[1], [0], [0], [1], [0, 0, 1, 1], [], []>} : vector<8x32xf32>, vector<32x32xf32>, vector<8x32xf32> -> vector<8x32xf32>
    %c1_103 = arith.constant 1 : index
    %c0_104 = arith.constant 0 : index
    %c0_105 = arith.constant 0 : index
    %211 = vector.load %arg9[%c1_103, %c0_104, %c0_105] : memref<2x1x32xf32, #tpu.memory_space<vmem>>, vector<1x1x32xf32>
    %212 = vector.shape_cast %211 : vector<1x1x32xf32> to vector<1x32xf32>
    %213 = vector.broadcast %212 : vector<1x32xf32> to vector<8x32xf32>
    %214 = arith.addf %210, %213 : vector<8x32xf32>
    %215 = arith.addf %139, %214 : vector<8x32xf32>
    %c1_106 = arith.constant 1 : index
    %c0_107 = arith.constant 0 : index
    %c0_108 = arith.constant 0 : index
    %216 = vector.load %arg10[%c1_106, %c0_107, %c0_108] : memref<2x1x32xf32, #tpu.memory_space<vmem>>, vector<1x1x32xf32>
    %217 = vector.shape_cast %216 : vector<1x1x32xf32> to vector<1x32xf32>
    %c1_109 = arith.constant 1 : index
    %c0_110 = arith.constant 0 : index
    %c0_111 = arith.constant 0 : index
    %218 = vector.load %arg11[%c1_109, %c0_110, %c0_111] : memref<2x1x32xf32, #tpu.memory_space<vmem>>, vector<1x1x32xf32>
    %219 = vector.shape_cast %218 : vector<1x1x32xf32> to vector<1x32xf32>
    %cst_112 = arith.constant dense<0.000000e+00> : vector<8xf32>
    %220 = vector.multi_reduction <add>, %215, %cst_112 [1] : vector<8x32xf32> to vector<8xf32>
    %221 = vector.shape_cast %220 : vector<8xf32> to vector<8x1xf32>
    %cst_113 = arith.constant 3.200000e+01 : f32
    %222 = vector.broadcast %cst_113 : f32 to vector<8x1xf32>
    %223 = arith.divf %221, %222 : vector<8x1xf32>
    %224 = vector.broadcast %223 : vector<8x1xf32> to vector<8x32xf32>
    %225 = arith.subf %215, %224 : vector<8x32xf32>
    %226 = arith.mulf %225, %225 : vector<8x32xf32>
    %cst_114 = arith.constant dense<0.000000e+00> : vector<8xf32>
    %227 = vector.multi_reduction <add>, %226, %cst_114 [1] : vector<8x32xf32> to vector<8xf32>
    %228 = vector.shape_cast %227 : vector<8xf32> to vector<8x1xf32>
    %cst_115 = arith.constant 3.200000e+01 : f32
    %229 = vector.broadcast %cst_115 : f32 to vector<8x1xf32>
    %230 = arith.divf %228, %229 : vector<8x1xf32>
    %cst_116 = arith.constant 9.99999997E-7 : f32
    %231 = vector.broadcast %cst_116 : f32 to vector<8x1xf32>
    %232 = arith.addf %230, %231 : vector<8x1xf32>
    %233 = math.rsqrt %232 : vector<8x1xf32>
    %234 = vector.broadcast %233 : vector<8x1xf32> to vector<8x32xf32>
    %235 = arith.mulf %225, %234 : vector<8x32xf32>
    %236 = vector.broadcast %217 : vector<1x32xf32> to vector<8x32xf32>
    %237 = arith.mulf %235, %236 : vector<8x32xf32>
    %238 = vector.broadcast %219 : vector<1x32xf32> to vector<8x32xf32>
    %239 = arith.addf %237, %238 : vector<8x32xf32>
    %c1_117 = arith.constant 1 : index
    %c0_118 = arith.constant 0 : index
    %c0_119 = arith.constant 0 : index
    %240 = vector.load %arg12[%c1_117, %c0_118, %c0_119] : memref<2x32x128xf32, #tpu.memory_space<vmem>>, vector<1x32x128xf32>
    %241 = vector.shape_cast %240 : vector<1x32x128xf32> to vector<32x128xf32>
    %cst_120 = arith.constant dense<0.000000e+00> : vector<8x128xf32>
    %242 = tpu.matmul %239, %241, %cst_120 {dimension_numbers = #tpu.dot_dimension_numbers<[1], [0], [0], [1], [0, 0, 1, 1], [], []>} : vector<8x32xf32>, vector<32x128xf32>, vector<8x128xf32> -> vector<8x128xf32>
    %c1_121 = arith.constant 1 : index
    %c0_122 = arith.constant 0 : index
    %c0_123 = arith.constant 0 : index
    %243 = vector.load %arg13[%c1_121, %c0_122, %c0_123] : memref<2x1x128xf32, #tpu.memory_space<vmem>>, vector<1x1x128xf32>
    %244 = vector.shape_cast %243 : vector<1x1x128xf32> to vector<1x128xf32>
    %245 = vector.broadcast %244 : vector<1x128xf32> to vector<8x128xf32>
    %246 = arith.addf %242, %245 : vector<8x128xf32>
    %247 = arith.mulf %246, %246 : vector<8x128xf32>
    %248 = arith.mulf %246, %247 : vector<8x128xf32>
    %cst_124 = arith.constant 4.471500e-02 : f32
    %249 = vector.broadcast %cst_124 : f32 to vector<8x128xf32>
    %250 = arith.mulf %249, %248 : vector<8x128xf32>
    %251 = arith.addf %246, %250 : vector<8x128xf32>
    %cst_125 = arith.constant 0.797884583 : f32
    %252 = vector.broadcast %cst_125 : f32 to vector<8x128xf32>
    %253 = arith.mulf %252, %251 : vector<8x128xf32>
    %254 = math.tanh %253 : vector<8x128xf32>
    %cst_126 = arith.constant 1.000000e+00 : f32
    %255 = vector.broadcast %cst_126 : f32 to vector<8x128xf32>
    %256 = arith.addf %255, %254 : vector<8x128xf32>
    %cst_127 = arith.constant 5.000000e-01 : f32
    %257 = vector.broadcast %cst_127 : f32 to vector<8x128xf32>
    %258 = arith.mulf %257, %256 : vector<8x128xf32>
    %259 = arith.mulf %246, %258 : vector<8x128xf32>
    %c1_128 = arith.constant 1 : index
    %c0_129 = arith.constant 0 : index
    %c0_130 = arith.constant 0 : index
    %260 = vector.load %arg14[%c1_128, %c0_129, %c0_130] : memref<2x128x32xf32, #tpu.memory_space<vmem>>, vector<1x128x32xf32>
    %261 = vector.shape_cast %260 : vector<1x128x32xf32> to vector<128x32xf32>
    %cst_131 = arith.constant dense<0.000000e+00> : vector<8x32xf32>
    %262 = tpu.matmul %259, %261, %cst_131 {dimension_numbers = #tpu.dot_dimension_numbers<[1], [0], [0], [1], [0, 0, 1, 1], [], []>} : vector<8x128xf32>, vector<128x32xf32>, vector<8x32xf32> -> vector<8x32xf32>
    %c1_132 = arith.constant 1 : index
    %c0_133 = arith.constant 0 : index
    %c0_134 = arith.constant 0 : index
    %263 = vector.load %arg15[%c1_132, %c0_133, %c0_134] : memref<2x1x32xf32, #tpu.memory_space<vmem>>, vector<1x1x32xf32>
    %264 = vector.shape_cast %263 : vector<1x1x32xf32> to vector<1x32xf32>
    %265 = vector.broadcast %264 : vector<1x32xf32> to vector<8x32xf32>
    %266 = arith.addf %262, %265 : vector<8x32xf32>
    %267 = arith.addf %215, %266 : vector<8x32xf32>
    %c0_135 = arith.constant 0 : index
    %c0_136 = arith.constant 0 : index
    %268 = vector.load %arg16[%c0_135, %c0_136] : memref<1x32xf32, #tpu.memory_space<vmem>>, vector<1x32xf32>
    %c0_137 = arith.constant 0 : index
    %c0_138 = arith.constant 0 : index
    %269 = vector.load %arg17[%c0_137, %c0_138] : memref<1x32xf32, #tpu.memory_space<vmem>>, vector<1x32xf32>
    %cst_139 = arith.constant dense<0.000000e+00> : vector<8xf32>
    %270 = vector.multi_reduction <add>, %267, %cst_139 [1] : vector<8x32xf32> to vector<8xf32>
    %271 = vector.shape_cast %270 : vector<8xf32> to vector<8x1xf32>
    %cst_140 = arith.constant 3.200000e+01 : f32
    %272 = vector.broadcast %cst_140 : f32 to vector<8x1xf32>
    %273 = arith.divf %271, %272 : vector<8x1xf32>
    %274 = vector.broadcast %273 : vector<8x1xf32> to vector<8x32xf32>
    %275 = arith.subf %267, %274 : vector<8x32xf32>
    %276 = arith.mulf %275, %275 : vector<8x32xf32>
    %cst_141 = arith.constant dense<0.000000e+00> : vector<8xf32>
    %277 = vector.multi_reduction <add>, %276, %cst_141 [1] : vector<8x32xf32> to vector<8xf32>
    %278 = vector.shape_cast %277 : vector<8xf32> to vector<8x1xf32>
    %cst_142 = arith.constant 3.200000e+01 : f32
    %279 = vector.broadcast %cst_142 : f32 to vector<8x1xf32>
    %280 = arith.divf %278, %279 : vector<8x1xf32>
    %cst_143 = arith.constant 9.99999997E-7 : f32
    %281 = vector.broadcast %cst_143 : f32 to vector<8x1xf32>
    %282 = arith.addf %280, %281 : vector<8x1xf32>
    %283 = math.rsqrt %282 : vector<8x1xf32>
    %284 = vector.broadcast %283 : vector<8x1xf32> to vector<8x32xf32>
    %285 = arith.mulf %275, %284 : vector<8x32xf32>
    %286 = vector.broadcast %268 : vector<1x32xf32> to vector<8x32xf32>
    %287 = arith.mulf %285, %286 : vector<8x32xf32>
    %288 = vector.broadcast %269 : vector<1x32xf32> to vector<8x32xf32>
    %289 = arith.addf %287, %288 : vector<8x32xf32>
    %290 = vector.extract_strided_slice %289 {offsets = [0, 0], sizes = [1, 32], strides = [1, 1]} : vector<8x32xf32> to vector<1x32xf32>
    %c0_144 = arith.constant 0 : index
    %c0_145 = arith.constant 0 : index
    %c0_146 = arith.constant 0 : index
    %291 = vector.load %arg20[%c0_144, %c0_145, %c0_146] : memref<1x1x32xf32, #tpu.memory_space<vmem>>, vector<1x1x32xf32>
    %292 = vector.shape_cast %291 : vector<1x1x32xf32> to vector<1x32xf32>
    %293 = vector.shape_cast %290 : vector<1x32xf32> to vector<1x1x32xf32>
    tpu.vector_store %arg20[%c0_144, %c0_145, %c0_146], %293 {strides = array<i32>} : memref<1x1x32xf32, #tpu.memory_space<vmem>>, vector<1x1x32xf32>,
    %c0_147 = arith.constant 0 : index
    %c0_148 = arith.constant 0 : index
    %294 = vector.load %arg18[%c0_147, %c0_148] : memref<32x10xf32, #tpu.memory_space<vmem>>, vector<32x10xf32>
    %cst_149 = arith.constant dense<0.000000e+00> : vector<1x10xf32>
    %295 = tpu.matmul %290, %294, %cst_149 {dimension_numbers = #tpu.dot_dimension_numbers<[1], [0], [0], [1], [0, 0, 1, 1], [], []>} : vector<1x32xf32>, vector<32x10xf32>, vector<1x10xf32> -> vector<1x10xf32>
    %c0_150 = arith.constant 0 : index
    %c0_151 = arith.constant 0 : index
    %296 = vector.load %arg19[%c0_150, %c0_151] : memref<1x10xf32, #tpu.memory_space<vmem>>, vector<1x10xf32>
    %297 = arith.addf %295, %296 : vector<1x10xf32>
    %c0_152 = arith.constant 0 : index
    %c0_153 = arith.constant 0 : index
    %c0_154 = arith.constant 0 : index
    %298 = vector.load %arg21[%c0_152, %c0_153, %c0_154] : memref<1x1x10xf32, #tpu.memory_space<vmem>>, vector<1x1x10xf32>
    %299 = vector.shape_cast %298 : vector<1x1x10xf32> to vector<1x10xf32>
    %300 = vector.shape_cast %297 : vector<1x10xf32> to vector<1x1x10xf32>
    tpu.vector_store %arg21[%c0_152, %c0_153, %c0_154], %300 {strides = array<i32>} : memref<1x1x10xf32, #tpu.memory_space<vmem>>, vector<1x1x10xf32>,
    return
  }
  func.func @transform_0(%arg0: i32) -> (i32, i32, i32) {
    %c0_i32 = arith.constant 0 : i32
    %c0_i32_0 = arith.constant 0 : i32
    %c0_i32_1 = arith.constant 0 : i32
    return %arg0, %c0_i32, %c0_i32_0 : i32, i32, i32
  }
  func.func @transform_1(%arg0: i32) -> (i32, i32) {
    %c0_i32 = arith.constant 0 : i32
    %c0_i32_0 = arith.constant 0 : i32
    %c0_i32_1 = arith.constant 0 : i32
    return %c0_i32, %c0_i32_0 : i32, i32
  }
  func.func @transform_2(%arg0: i32) -> (i32, i32) {
    %c0_i32 = arith.constant 0 : i32
    %c0_i32_0 = arith.constant 0 : i32
    %c0_i32_1 = arith.constant 0 : i32
    return %c0_i32, %c0_i32_0 : i32, i32
  }
  func.func @transform_3(%arg0: i32) -> (i32, i32, i32) {
    %c0_i32 = arith.constant 0 : i32
    %c0_i32_0 = arith.constant 0 : i32
    %c0_i32_1 = arith.constant 0 : i32
    %c0_i32_2 = arith.constant 0 : i32
    return %c0_i32, %c0_i32_0, %c0_i32_1 : i32, i32, i32
  }
  func.func @transform_4(%arg0: i32) -> (i32, i32, i32) {
    %c0_i32 = arith.constant 0 : i32
    %c0_i32_0 = arith.constant 0 : i32
    %c0_i32_1 = arith.constant 0 : i32
    %c0_i32_2 = arith.constant 0 : i32
    return %c0_i32, %c0_i32_0, %c0_i32_1 : i32, i32, i32
  }
  func.func @transform_5(%arg0: i32) -> (i32, i32, i32) {
    %c0_i32 = arith.constant 0 : i32
    %c0_i32_0 = arith.constant 0 : i32
    %c0_i32_1 = arith.constant 0 : i32
    %c0_i32_2 = arith.constant 0 : i32
    return %c0_i32, %c0_i32_0, %c0_i32_1 : i32, i32, i32
  }
  func.func @transform_6(%arg0: i32) -> (i32, i32, i32) {
    %c0_i32 = arith.constant 0 : i32
    %c0_i32_0 = arith.constant 0 : i32
    %c0_i32_1 = arith.constant 0 : i32
    %c0_i32_2 = arith.constant 0 : i32
    return %c0_i32, %c0_i32_0, %c0_i32_1 : i32, i32, i32
  }
  func.func @transform_7(%arg0: i32) -> (i32, i32, i32) {
    %c0_i32 = arith.constant 0 : i32
    %c0_i32_0 = arith.constant 0 : i32
    %c0_i32_1 = arith.constant 0 : i32
    %c0_i32_2 = arith.constant 0 : i32
    return %c0_i32, %c0_i32_0, %c0_i32_1 : i32, i32, i32
  }
  func.func @transform_8(%arg0: i32) -> (i32, i32, i32) {
    %c0_i32 = arith.constant 0 : i32
    %c0_i32_0 = arith.constant 0 : i32
    %c0_i32_1 = arith.constant 0 : i32
    %c0_i32_2 = arith.constant 0 : i32
    return %c0_i32, %c0_i32_0, %c0_i32_1 : i32, i32, i32
  }
  func.func @transform_9(%arg0: i32) -> (i32, i32, i32) {
    %c0_i32 = arith.constant 0 : i32
    %c0_i32_0 = arith.constant 0 : i32
    %c0_i32_1 = arith.constant 0 : i32
    %c0_i32_2 = arith.constant 0 : i32
    return %c0_i32, %c0_i32_0, %c0_i32_1 : i32, i32, i32
  }
  func.func @transform_10(%arg0: i32) -> (i32, i32, i32) {
    %c0_i32 = arith.constant 0 : i32
    %c0_i32_0 = arith.constant 0 : i32
    %c0_i32_1 = arith.constant 0 : i32
    %c0_i32_2 = arith.constant 0 : i32
    return %c0_i32, %c0_i32_0, %c0_i32_1 : i32, i32, i32
  }
  func.func @transform_11(%arg0: i32) -> (i32, i32, i32) {
    %c0_i32 = arith.constant 0 : i32
    %c0_i32_0 = arith.constant 0 : i32
    %c0_i32_1 = arith.constant 0 : i32
    %c0_i32_2 = arith.constant 0 : i32
    return %c0_i32, %c0_i32_0, %c0_i32_1 : i32, i32, i32
  }
  func.func @transform_12(%arg0: i32) -> (i32, i32, i32) {
    %c0_i32 = arith.constant 0 : i32
    %c0_i32_0 = arith.constant 0 : i32
    %c0_i32_1 = arith.constant 0 : i32
    %c0_i32_2 = arith.constant 0 : i32
    return %c0_i32, %c0_i32_0, %c0_i32_1 : i32, i32, i32
  }
  func.func @transform_13(%arg0: i32) -> (i32, i32, i32) {
    %c0_i32 = arith.constant 0 : i32
    %c0_i32_0 = arith.constant 0 : i32
    %c0_i32_1 = arith.constant 0 : i32
    %c0_i32_2 = arith.constant 0 : i32
    return %c0_i32, %c0_i32_0, %c0_i32_1 : i32, i32, i32
  }
  func.func @transform_14(%arg0: i32) -> (i32, i32, i32) {
    %c0_i32 = arith.constant 0 : i32
    %c0_i32_0 = arith.constant 0 : i32
    %c0_i32_1 = arith.constant 0 : i32
    %c0_i32_2 = arith.constant 0 : i32
    return %c0_i32, %c0_i32_0, %c0_i32_1 : i32, i32, i32
  }
  func.func @transform_15(%arg0: i32) -> (i32, i32) {
    %c0_i32 = arith.constant 0 : i32
    %c0_i32_0 = arith.constant 0 : i32
    %c0_i32_1 = arith.constant 0 : i32
    return %c0_i32, %c0_i32_0 : i32, i32
  }
  func.func @transform_16(%arg0: i32) -> (i32, i32) {
    %c0_i32 = arith.constant 0 : i32
    %c0_i32_0 = arith.constant 0 : i32
    %c0_i32_1 = arith.constant 0 : i32
    return %c0_i32, %c0_i32_0 : i32, i32
  }
  func.func @transform_17(%arg0: i32) -> (i32, i32) {
    %c0_i32 = arith.constant 0 : i32
    %c0_i32_0 = arith.constant 0 : i32
    %c0_i32_1 = arith.constant 0 : i32
    return %c0_i32, %c0_i32_0 : i32, i32
  }
  func.func @transform_18(%arg0: i32) -> (i32, i32) {
    %c0_i32 = arith.constant 0 : i32
    %c0_i32_0 = arith.constant 0 : i32
    %c0_i32_1 = arith.constant 0 : i32
    return %c0_i32, %c0_i32_0 : i32, i32
  }
  func.func @transform_19(%arg0: i32) -> (i32, i32, i32) {
    %c0_i32 = arith.constant 0 : i32
    %c0_i32_0 = arith.constant 0 : i32
    %c0_i32_1 = arith.constant 0 : i32
    return %arg0, %c0_i32, %c0_i32_0 : i32, i32, i32
  }
  func.func @transform_20(%arg0: i32) -> (i32, i32, i32) {
    %c0_i32 = arith.constant 0 : i32
    %c0_i32_0 = arith.constant 0 : i32
    %c0_i32_1 = arith.constant 0 : i32
    return %arg0, %c0_i32, %c0_i32_0 : i32, i32, i32
  }
}

</mosaic_0001>

<llo_original>
// kernel: vit_zoo_forward.1
$region0: #{vit_zoo_forward.1}
  #allocation0 [shape = 'u32[]', space=smem, size = 0x4, offset = 0x4, fixed_abs, tag = 'smem constant byte address 0x4 - core index']
  #allocation1 [shape = 'u32[72,128]{1,0:T(1,128)}', space=vmem, size = 0x9000, scoped, tag = 'internal scratch']
  %s0 = inlined_call_operand.vmem [shape: f32[2,8,768], index: 0, kind: input, shape index: {}]
  %s1 = inlined_call_operand.vmem [shape: f32[8,32], index: 1, kind: input, shape index: {}]
  %s2 = inlined_call_operand.vmem [shape: f32[768,32], index: 2, kind: input, shape index: {}]
  %s3 = inlined_call_operand.vmem [shape: f32[2,1,32], index: 3, kind: input, shape index: {}]
  %s4 = inlined_call_operand.vmem [shape: f32[2,1,32], index: 4, kind: input, shape index: {}]
  %s5 = inlined_call_operand.vmem [shape: f32[2,32,96], index: 5, kind: input, shape index: {}]
  %s6 = inlined_call_operand.vmem [shape: f32[2,1,96], index: 6, kind: input, shape index: {}]
  %s7 = inlined_call_operand.vmem [shape: f32[2,32,32], index: 7, kind: input, shape index: {}]
  %s8 = inlined_call_operand.vmem [shape: f32[2,1,32], index: 8, kind: input, shape index: {}]
  %s9 = inlined_call_operand.vmem [shape: f32[2,1,32], index: 9, kind: input, shape index: {}]
  %s10 = inlined_call_operand.vmem [shape: f32[2,1,32], index: 10, kind: input, shape index: {}]
  %s11 = inlined_call_operand.vmem [shape: f32[2,32,128], index: 11, kind: input, shape index: {}]
  %s12 = inlined_call_operand.vmem [shape: f32[2,1,128], index: 12, kind: input, shape index: {}]
  %s13 = inlined_call_operand.vmem [shape: f32[2,128,32], index: 13, kind: input, shape index: {}]
  %s14 = inlined_call_operand.vmem [shape: f32[2,1,32], index: 14, kind: input, shape index: {}]
  %s15 = inlined_call_operand.vmem [shape: f32[1,32], index: 15, kind: input, shape index: {}]
  %s16 = inlined_call_operand.vmem [shape: f32[1,32], index: 16, kind: input, shape index: {}]
  %s17 = inlined_call_operand.vmem [shape: f32[32,10], index: 17, kind: input, shape index: {}]
  %s18 = inlined_call_operand.vmem [shape: f32[1,10], index: 18, kind: input, shape index: {}]
  %s19 = inlined_call_operand.hbm [shape: f32[2,1,32], index: 19, kind: output, shape index: {0}]
  %s20 = inlined_call_operand.hbm [shape: f32[2,1,10], index: 20, kind: output, shape index: {1}]
  %21 = xla_tuple %s19, %s20
  %s22 = sld [smem:[#allocation0]]
  $region117: #{vit_zoo_forward.1} parent=0
    _
  %s24 = ssub.s32 1, %s22
  %s25 = scalar_select 0, %s24, %s22
  $region1: #{vit_zoo_forward.1} parent=0
    #allocation2 [shape = 'u8[1024]{0}', space=vmem, size = 0x400, scoped, tag = 'output window, operand 0']
    #allocation3 [shape = 's32[2]{0}', space=sflag, size = 0x8, scoped, tag = 'scoped memory for vit_zoo_forward.1']
    #allocation4 [shape = 'u8[1024]{0}', space=vmem, size = 0x400, scoped, tag = 'output window, operand 1']
    #allocation5 [shape = 's32[2]{0}', space=sflag, size = 0x8, scoped, tag = 'scoped memory for vit_zoo_forward.1']
    %26 = vsyncpa [#allocation3], 0
    %s27 = scalar_lea.sflag [#allocation3], 1
    %28 = vsyncpa %s27, 0
    %29 = vsyncpa [#allocation5], 0
    %s30 = scalar_lea.sflag [#allocation5], 1
    %31 = vsyncpa %s30, 0
    loop: start=0, step=1, limit=4
    $region2: #{vit_zoo_forward.1} parent=1 // loop_pre_header
      _
    $region3: #{vit_zoo_forward.1} parent=1 // loop_header
      %s33 = sphi 0, %s37
      %p34 = scmp.ge.s32.totalorder %s33, 4
      %s43 = sphi 0, %s45
      %s46 = sphi 0, %s43
      %s47 = sphi 0, %s46
      %s63 = sphi 0, %s47
      %s67 = sphi 0, %s67
      %s69 = sphi 0, %s67
      %s70 = sphi 0, %s69
      %s84 = sphi 0, %s70
      %s88 = sphi 0, %s88
      %s90 = sphi 0, %s88
      %s91 = sphi 0, %s90
      %s105 = sphi 0, %s91
      %s109 = sphi 0, %s109
      %s111 = sphi 0, %s109
      %s112 = sphi 0, %s111
      %s126 = sphi 0, %s112
      %s130 = sphi 0, %s130
      %s132 = sphi 0, %s130
      %s133 = sphi 0, %s132
      %s147 = sphi 0, %s133
      %s151 = sphi 0, %s151
      %s153 = sphi 0, %s151
      %s154 = sphi 0, %s153
      %s168 = sphi 0, %s154
      %s172 = sphi 0, %s172
      %s174 = sphi 0, %s172
      %s175 = sphi 0, %s174
      %s189 = sphi 0, %s175
      %s193 = sphi 0, %s193
      %s195 = sphi 0, %s193
      %s196 = sphi 0, %s195
      %s210 = sphi 0, %s196
      %s214 = sphi 0, %s214
      %s216 = sphi 0, %s214
      %s217 = sphi 0, %s216
      %s231 = sphi 0, %s217
      %s235 = sphi 0, %s235
      %s237 = sphi 0, %s235
      %s238 = sphi 0, %s237
      %s252 = sphi 0, %s238
      %s256 = sphi 0, %s256
      %s258 = sphi 0, %s256
      %s259 = sphi 0, %s258
      %s273 = sphi 0, %s259
      %s277 = sphi 0, %s277
      %s279 = sphi 0, %s277
      %s280 = sphi 0, %s279
      %s294 = sphi 0, %s280
      %s298 = sphi 0, %s298
      %s300 = sphi 0, %s298
      %s301 = sphi 0, %s300
      %s315 = sphi 0, %s301
      %s319 = sphi 0, %s319
      %s321 = sphi 0, %s319
      %s322 = sphi 0, %s321
      %s336 = sphi 0, %s322
      %s340 = sphi 0, %s340
      %s342 = sphi 0, %s340
      %s343 = sphi 0, %s342
      %s357 = sphi 0, %s343
      %s361 = sphi 0, %s361
      %s363 = sphi 0, %s361
      %s364 = sphi 0, %s363
      %s378 = sphi 0, %s364
      %s382 = sphi 0, %s382
      %s384 = sphi 0, %s382
      %s385 = sphi 0, %s384
      %s399 = sphi 0, %s385
      %s403 = sphi 0, %s403
      %s405 = sphi 0, %s403
      %s406 = sphi 0, %s405
      %s420 = sphi 0, %s406
      %s424 = sphi 0, %s424
      %s426 = sphi 0, %s424
      %s427 = sphi 0, %s426
      %s441 = sphi 0, %s427
      %s447 = sphi 0, %s449
      %s450 = sphi 0, %s447
      %s451 = sphi 0, %s450
      %s467 = sphi 0, %s451
      %s473 = sphi 0, %s475
      %s476 = sphi 0, %s473
      %s477 = sphi 0, %s476
      %s493 = sphi 0, %s477
    $region4: #{vit_zoo_forward.1} parent=1 // loop_header_branch
      %36 = sbr.rel (%p34) target = $region8
    $region5: #{vit_zoo_forward.1} parent=1 // loop_body
      %s38 = ssub.s32 %s33, 1
      %s39 = ssub.s32 %s33, 2
      %s40 = sadd.s32 %s33, 1
      %s41 = ssub.s32 %s33, %s40
      %p42 = scmp.eq.s32.totalorder %s41, 0
      %s44 = sadd.s32 %s43, 1
      %s45 = scalar_select %p42, %s43, %s44
      %p48 = pneg %p42
      %p49 = scmp.eq.s32.totalorder %s33, 1
      %p50 = por %p48, %p49
      %p51 = scmp.ne.s32.totalorder %s43, %s46
      %p52 = scmp.eq.s32.totalorder %s33, 0
      %p53 = por %p51, %p52
      %p54 = scmp.ne.s32.totalorder %s43, %s46
      %p55 = scmp.eq.s32.totalorder %s38, 1
      %p56 = por %p54, %p55
      %p57 = scmp.ne.s32.totalorder %s46, %s47
      %p58 = scmp.eq.s32.totalorder %s38, 0
      %p59 = por %p57, %p58
      %p60 = scmp.ne.s32.totalorder %s46, %s47
      %p61 = scmp.eq.s32.totalorder %s39, 1
      %p62 = por %p60, %p61
      %p64 = scmp.ne.s32.totalorder %s47, %s63
      %p65 = scmp.eq.s32.totalorder %s39, 0
      %p66 = por %p64, %p65
      %s68 = sadd.s32 %s67, 1
      %p71 = scmp.eq.s32.totalorder %s33, 1
      %p72 = scmp.ne.s32.totalorder %s67, %s69
      %p73 = scmp.eq.s32.totalorder %s33, 0
      %p74 = por %p72, %p73
      %p75 = scmp.ne.s32.totalorder %s67, %s69
      %p76 = scmp.eq.s32.totalorder %s38, 1
      %p77 = por %p75, %p76
      %p78 = scmp.ne.s32.totalorder %s69, %s70
      %p79 = scmp.eq.s32.totalorder %s38, 0
      %p80 = por %p78, %p79
      %p81 = scmp.ne.s32.totalorder %s69, %s70
      %p82 = scmp.eq.s32.totalorder %s39, 1
      %p83 = por %p81, %p82
      %p85 = scmp.ne.s32.totalorder %s70, %s84
      %p86 = scmp.eq.s32.totalorder %s39, 0
      %p87 = por %p85, %p86
      %s89 = sadd.s32 %s88, 1
      %p92 = scmp.eq.s32.totalorder %s33, 1
      %p93 = scmp.ne.s32.totalorder %s88, %s90
      %p94 = scmp.eq.s32.totalorder %s33, 0
      %p95 = por %p93, %p94
      %p96 = scmp.ne.s32.totalorder %s88, %s90
      %p97 = scmp.eq.s32.totalorder %s38, 1
      %p98 = por %p96, %p97
      %p99 = scmp.ne.s32.totalorder %s90, %s91
      %p100 = scmp.eq.s32.totalorder %s38, 0
      %p101 = por %p99, %p100
      %p102 = scmp.ne.s32.totalorder %s90, %s91
      %p103 = scmp.eq.s32.totalorder %s39, 1
      %p104 = por %p102, %p103
      %p106 = scmp.ne.s32.totalorder %s91, %s105
      %p107 = scmp.eq.s32.totalorder %s39, 0
      %p108 = por %p106, %p107
      %s110 = sadd.s32 %s109, 1
      %p113 = scmp.eq.s32.totalorder %s33, 1
      %p114 = scmp.ne.s32.totalorder %s109, %s111
      %p115 = scmp.eq.s32.totalorder %s33, 0
      %p116 = por %p114, %p115
      %p117 = scmp.ne.s32.totalorder %s109, %s111
      %p118 = scmp.eq.s32.totalorder %s38, 1
      %p119 = por %p117, %p118
      %p120 = scmp.ne.s32.totalorder %s111, %s112
      %p121 = scmp.eq.s32.totalorder %s38, 0
      %p122 = por %p120, %p121
      %p123 = scmp.ne.s32.totalorder %s111, %s112
      %p124 = scmp.eq.s32.totalorder %s39, 1
      %p125 = por %p123, %p124
      %p127 = scmp.ne.s32.totalorder %s112, %s126
      %p128 = scmp.eq.s32.totalorder %s39, 0
      %p129 = por %p127, %p128
      %s131 = sadd.s32 %s130, 1
      %p134 = scmp.eq.s32.totalorder %s33, 1
      %p135 = scmp.ne.s32.totalorder %s130, %s132
      %p136 = scmp.eq.s32.totalorder %s33, 0
      %p137 = por %p135, %p136
      %p138 = scmp.ne.s32.totalorder %s130, %s132
      %p139 = scmp.eq.s32.totalorder %s38, 1
      %p140 = por %p138, %p139
      %p141 = scmp.ne.s32.totalorder %s132, %s133
      %p142 = scmp.eq.s32.totalorder %s38, 0
      %p143 = por %p141, %p142
      %p144 = scmp.ne.s32.totalorder %s132, %s133
      %p145 = scmp.eq.s32.totalorder %s39, 1
      %p146 = por %p144, %p145
      %p148 = scmp.ne.s32.totalorder %s133, %s147
      %p149 = scmp.eq.s32.totalorder %s39, 0
      %p150 = por %p148, %p149
      %s152 = sadd.s32 %s151, 1
      %p155 = scmp.eq.s32.totalorder %s33, 1
      %p156 = scmp.ne.s32.totalorder %s151, %s153
      %p157 = scmp.eq.s32.totalorder %s33, 0
      %p158 = por %p156, %p157
      %p159 = scmp.ne.s32.totalorder %s151, %s153
      %p160 = scmp.eq.s32.totalorder %s38, 1
      %p161 = por %p159, %p160
      %p162 = scmp.ne.s32.totalorder %s153, %s154
      %p163 = scmp.eq.s32.totalorder %s38, 0
      %p164 = por %p162, %p163
      %p165 = scmp.ne.s32.totalorder %s153, %s154
      %p166 = scmp.eq.s32.totalorder %s39, 1
      %p167 = por %p165, %p166
      %p169 = scmp.ne.s32.totalorder %s154, %s168
      %p170 = scmp.eq.s32.totalorder %s39, 0
      %p171 = por %p169, %p170
      %s173 = sadd.s32 %s172, 1
      %p176 = scmp.eq.s32.totalorder %s33, 1
      %p177 = scmp.ne.s32.totalorder %s172, %s174
      %p178 = scmp.eq.s32.totalorder %s33, 0
      %p179 = por %p177, %p178
      %p180 = scmp.ne.s32.totalorder %s172, %s174
      %p181 = scmp.eq.s32.totalorder %s38, 1
      %p182 = por %p180, %p181
      %p183 = scmp.ne.s32.totalorder %s174, %s175
      %p184 = scmp.eq.s32.totalorder %s38, 0
      %p185 = por %p183, %p184
      %p186 = scmp.ne.s32.totalorder %s174, %s175
      %p187 = scmp.eq.s32.totalorder %s39, 1
      %p188 = por %p186, %p187
      %p190 = scmp.ne.s32.totalorder %s175, %s189
      %p191 = scmp.eq.s32.totalorder %s39, 0
      %p192 = por %p190, %p191
      %s194 = sadd.s32 %s193, 1
      %p197 = scmp.eq.s32.totalorder %s33, 1
      %p198 = scmp.ne.s32.totalorder %s193, %s195
      %p199 = scmp.eq.s32.totalorder %s33, 0
      %p200 = por %p198, %p199
      %p201 = scmp.ne.s32.totalorder %s193, %s195
      %p202 = scmp.eq.s32.totalorder %s38, 1
      %p203 = por %p201, %p202
      %p204 = scmp.ne.s32.totalorder %s195, %s196
      %p205 = scmp.eq.s32.totalorder %s38, 0
      %p206 = por %p204, %p205
      %p207 = scmp.ne.s32.totalorder %s195, %s196
      %p208 = scmp.eq.s32.totalorder %s39, 1
      %p209 = por %p207, %p208
      %p211 = scmp.ne.s32.totalorder %s196, %s210
      %p212 = scmp.eq.s32.totalorder %s39, 0
      %p213 = por %p211, %p212
      %s215 = sadd.s32 %s214, 1
      %p218 = scmp.eq.s32.totalorder %s33, 1
      %p219 = scmp.ne.s32.totalorder %s214, %s216
      %p220 = scmp.eq.s32.totalorder %s33, 0
      %p221 = por %p219, %p220
      %p222 = scmp.ne.s32.totalorder %s214, %s216
      %p223 = scmp.eq.s32.totalorder %s38, 1
      %p224 = por %p222, %p223
      %p225 = scmp.ne.s32.totalorder %s216, %s217
      %p226 = scmp.eq.s32.totalorder %s38, 0
      %p227 = por %p225, %p226
      %p228 = scmp.ne.s32.totalorder %s216, %s217
      %p229 = scmp.eq.s32.totalorder %s39, 1
      %p230 = por %p228, %p229
      %p232 = scmp.ne.s32.totalorder %s217, %s231
      %p233 = scmp.eq.s32.totalorder %s39, 0
      %p234 = por %p232, %p233
      %s236 = sadd.s32 %s235, 1
      %p239 = scmp.eq.s32.totalorder %s33, 1
      %p240 = scmp.ne.s32.totalorder %s235, %s237
      %p241 = scmp.eq.s32.totalorder %s33, 0
      %p242 = por %p240, %p241
      %p243 = scmp.ne.s32.totalorder %s235, %s237
      %p244 = scmp.eq.s32.totalorder %s38, 1
      %p245 = por %p243, %p244
      %p246 = scmp.ne.s32.totalorder %s237, %s238
      %p247 = scmp.eq.s32.totalorder %s38, 0
      %p248 = por %p246, %p247
      %p249 = scmp.ne.s32.totalorder %s237, %s238
      %p250 = scmp.eq.s32.totalorder %s39, 1
      %p251 = por %p249, %p250
      %p253 = scmp.ne.s32.totalorder %s238, %s252
      %p254 = scmp.eq.s32.totalorder %s39, 0
      %p255 = por %p253, %p254
      %s257 = sadd.s32 %s256, 1
      %p260 = scmp.eq.s32.totalorder %s33, 1
      %p261 = scmp.ne.s32.totalorder %s256, %s258
      %p262 = scmp.eq.s32.totalorder %s33, 0
      %p263 = por %p261, %p262
      %p264 = scmp.ne.s32.totalorder %s256, %s258
      %p265 = scmp.eq.s32.totalorder %s38, 1
      %p266 = por %p264, %p265
      %p267 = scmp.ne.s32.totalorder %s258, %s259
      %p268 = scmp.eq.s32.totalorder %s38, 0
      %p269 = por %p267, %p268
      %p270 = scmp.ne.s32.totalorder %s258, %s259
      %p271 = scmp.eq.s32.totalorder %s39, 1
      %p272 = por %p270, %p271
      %p274 = scmp.ne.s32.totalorder %s259, %s273
      %p275 = scmp.eq.s32.totalorder %s39, 0
      %p276 = por %p274, %p275
      %s278 = sadd.s32 %s277, 1
      %p281 = scmp.eq.s32.totalorder %s33, 1
      %p282 = scmp.ne.s32.totalorder %s277, %s279
      %p283 = scmp.eq.s32.totalorder %s33, 0
      %p284 = por %p282, %p283
      %p285 = scmp.ne.s32.totalorder %s277, %s279
      %p286 = scmp.eq.s32.totalorder %s38, 1
      %p287 = por %p285, %p286
      %p288 = scmp.ne.s32.totalorder %s279, %s280
      %p289 = scmp.eq.s32.totalorder %s38, 0
      %p290 = por %p288, %p289
      %p291 = scmp.ne.s32.totalorder %s279, %s280
      %p292 = scmp.eq.s32.totalorder %s39, 1
      %p293 = por %p291, %p292
      %p295 = scmp.ne.s32.totalorder %s280, %s294
      %p296 = scmp.eq.s32.totalorder %s39, 0
      %p297 = por %p295, %p296
      %s299 = sadd.s32 %s298, 1
      %p302 = scmp.eq.s32.totalorder %s33, 1
      %p303 = scmp.ne.s32.totalorder %s298, %s300
      %p304 = scmp.eq.s32.totalorder %s33, 0
      %p305 = por %p303, %p304
      %p306 = scmp.ne.s32.totalorder %s298, %s300
      %p307 = scmp.eq.s32.totalorder %s38, 1
      %p308 = por %p306, %p307
      %p309 = scmp.ne.s32.totalorder %s300, %s301
      %p310 = scmp.eq.s32.totalorder %s38, 0
      %p311 = por %p309, %p310
      %p312 = scmp.ne.s32.totalorder %s300, %s301
      %p313 = scmp.eq.s32.totalorder %s39, 1
      %p314 = por %p312, %p313
      %p316 = scmp.ne.s32.totalorder %s301, %s315
      %p317 = scmp.eq.s32.totalorder %s39, 0
      %p318 = por %p316, %p317
      %s320 = sadd.s32 %s319, 1
      %p323 = scmp.eq.s32.totalorder %s33, 1
      %p324 = scmp.ne.s32.totalorder %s319, %s321
      %p325 = scmp.eq.s32.totalorder %s33, 0
      %p326 = por %p324, %p325
      %p327 = scmp.ne.s32.totalorder %s319, %s321
      %p328 = scmp.eq.s32.totalorder %s38, 1
      %p329 = por %p327, %p328
      %p330 = scmp.ne.s32.totalorder %s321, %s322
      %p331 = scmp.eq.s32.totalorder %s38, 0
      %p332 = por %p330, %p331
      %p333 = scmp.ne.s32.totalorder %s321, %s322
      %p334 = scmp.eq.s32.totalorder %s39, 1
      %p335 = por %p333, %p334
      %p337 = scmp.ne.s32.totalorder %s322, %s336
      %p338 = scmp.eq.s32.totalorder %s39, 0
      %p339 = por %p337, %p338
      %s341 = sadd.s32 %s340, 1
      %p344 = scmp.eq.s32.totalorder %s33, 1
      %p345 = scmp.ne.s32.totalorder %s340, %s342
      %p346 = scmp.eq.s32.totalorder %s33, 0
      %p347 = por %p345, %p346
      %p348 = scmp.ne.s32.totalorder %s340, %s342
      %p349 = scmp.eq.s32.totalorder %s38, 1
      %p350 = por %p348, %p349
      %p351 = scmp.ne.s32.totalorder %s342, %s343
      %p352 = scmp.eq.s32.totalorder %s38, 0
      %p353 = por %p351, %p352
      %p354 = scmp.ne.s32.totalorder %s342, %s343
      %p355 = scmp.eq.s32.totalorder %s39, 1
      %p356 = por %p354, %p355
      %p358 = scmp.ne.s32.totalorder %s343, %s357
      %p359 = scmp.eq.s32.totalorder %s39, 0
      %p360 = por %p358, %p359
      %s362 = sadd.s32 %s361, 1
      %p365 = scmp.eq.s32.totalorder %s33, 1
      %p366 = scmp.ne.s32.totalorder %s361, %s363
      %p367 = scmp.eq.s32.totalorder %s33, 0
      %p368 = por %p366, %p367
      %p369 = scmp.ne.s32.totalorder %s361, %s363
      %p370 = scmp.eq.s32.totalorder %s38, 1
      %p371 = por %p369, %p370
      %p372 = scmp.ne.s32.totalorder %s363, %s364
      %p373 = scmp.eq.s32.totalorder %s38, 0
      %p374 = por %p372, %p373
      %p375 = scmp.ne.s32.totalorder %s363, %s364
      %p376 = scmp.eq.s32.totalorder %s39, 1
      %p377 = por %p375, %p376
      %p379 = scmp.ne.s32.totalorder %s364, %s378
      %p380 = scmp.eq.s32.totalorder %s39, 0
      %p381 = por %p379, %p380
      %s383 = sadd.s32 %s382, 1
      %p386 = scmp.eq.s32.totalorder %s33, 1
      %p387 = scmp.ne.s32.totalorder %s382, %s384
      %p388 = scmp.eq.s32.totalorder %s33, 0
      %p389 = por %p387, %p388
      %p390 = scmp.ne.s32.totalorder %s382, %s384
      %p391 = scmp.eq.s32.totalorder %s38, 1
      %p392 = por %p390, %p391
      %p393 = scmp.ne.s32.totalorder %s384, %s385
      %p394 = scmp.eq.s32.totalorder %s38, 0
      %p395 = por %p393, %p394
      %p396 = scmp.ne.s32.totalorder %s384, %s385
      %p397 = scmp.eq.s32.totalorder %s39, 1
      %p398 = por %p396, %p397
      %p400 = scmp.ne.s32.totalorder %s385, %s399
      %p401 = scmp.eq.s32.totalorder %s39, 0
      %p402 = por %p400, %p401
      %s404 = sadd.s32 %s403, 1
      %p407 = scmp.eq.s32.totalorder %s33, 1
      %p408 = scmp.ne.s32.totalorder %s403, %s405
      %p409 = scmp.eq.s32.totalorder %s33, 0
      %p410 = por %p408, %p409
      %p411 = scmp.ne.s32.totalorder %s403, %s405
      %p412 = scmp.eq.s32.totalorder %s38, 1
      %p413 = por %p411, %p412
      %p414 = scmp.ne.s32.totalorder %s405, %s406
      %p415 = scmp.eq.s32.totalorder %s38, 0
      %p416 = por %p414, %p415
      %p417 = scmp.ne.s32.totalorder %s405, %s406
      %p418 = scmp.eq.s32.totalorder %s39, 1
      %p419 = por %p417, %p418
      %p421 = scmp.ne.s32.totalorder %s406, %s420
      %p422 = scmp.eq.s32.totalorder %s39, 0
      %p423 = por %p421, %p422
      %s425 = sadd.s32 %s424, 1
      %p428 = scmp.eq.s32.totalorder %s33, 1
      %p429 = scmp.ne.s32.totalorder %s424, %s426
      %p430 = scmp.eq.s32.totalorder %s33, 0
      %p431 = por %p429, %p430
      %p432 = scmp.ne.s32.totalorder %s424, %s426
      %p433 = scmp.eq.s32.totalorder %s38, 1
      %p434 = por %p432, %p433
      %p435 = scmp.ne.s32.totalorder %s426, %s427
      %p436 = scmp.eq.s32.totalorder %s38, 0
      %p437 = por %p435, %p436
      %p438 = scmp.ne.s32.totalorder %s426, %s427
      %p439 = scmp.eq.s32.totalorder %s39, 1
      %p440 = por %p438, %p439
      %p442 = scmp.ne.s32.totalorder %s427, %s441
      %p443 = scmp.eq.s32.totalorder %s39, 0
      %p444 = por %p442, %p443
      %s445 = ssub.s32 %s33, %s40
      %p446 = scmp.eq.s32.totalorder %s445, 0
      %s448 = sadd.s32 %s447, 1
      %s449 = scalar_select %p446, %s447, %s448
      %p452 = pneg %p446
      %p453 = scmp.eq.s32.totalorder %s33, 1
      %p454 = por %p452, %p453
      %p455 = scmp.ne.s32.totalorder %s447, %s450
      %p456 = scmp.eq.s32.totalorder %s33, 0
      %p457 = por %p455, %p456
      %p458 = scmp.ne.s32.totalorder %s447, %s450
      %p459 = scmp.eq.s32.totalorder %s38, 1
      %p460 = por %p458, %p459
      %p461 = scmp.ne.s32.totalorder %s450, %s451
      %p462 = scmp.eq.s32.totalorder %s38, 0
      %p463 = por %p461, %p462
      %p464 = scmp.ne.s32.totalorder %s450, %s451
      %p465 = scmp.eq.s32.totalorder %s39, 1
      %p466 = por %p464, %p465
      %p468 = scmp.ne.s32.totalorder %s451, %s467
      %p469 = scmp.eq.s32.totalorder %s39, 0
      %p470 = por %p468, %p469
      %s471 = ssub.s32 %s33, %s40
      %p472 = scmp.eq.s32.totalorder %s471, 0
      %s474 = sadd.s32 %s473, 1
      %s475 = scalar_select %p472, %s473, %s474
      %p478 = pneg %p472
      %p479 = scmp.eq.s32.totalorder %s33, 1
      %p480 = por %p478, %p479
      %p481 = scmp.ne.s32.totalorder %s473, %s476
      %p482 = scmp.eq.s32.totalorder %s33, 0
      %p483 = por %p481, %p482
      %p484 = scmp.ne.s32.totalorder %s473, %s476
      %p485 = scmp.eq.s32.totalorder %s38, 1
      %p486 = por %p484, %p485
      %p487 = scmp.ne.s32.totalorder %s476, %s477
      %p488 = scmp.eq.s32.totalorder %s38, 0
      %p489 = por %p487, %p488
      %p490 = scmp.ne.s32.totalorder %s476, %s477
      %p491 = scmp.eq.s32.totalorder %s39, 1
      %p492 = por %p490, %p491
      %p494 = scmp.ne.s32.totalorder %s477, %s493
      %p495 = scmp.eq.s32.totalorder %s39, 0
      %p496 = por %p494, %p495
      %p497 = scmp.le.s32.totalorder 1, %s33
      %p498 = scmp.lt.s32.totalorder %s33, 3
      %p499 = pnand %p497, %p498
      %p500 = pneg %p499
      // Predicated region
      $region9: #{vit_zoo_forward.1} parent=5 // pred_check
        _
      $region10: #{vit_zoo_forward.1} parent=5 // pred_check_branch
        %502 = sbr.rel (%p499) target = $region12
      $region11: #{vit_zoo_forward.1} parent=5 // pred_region
        %s503 = ssub.s32 %s33, 1
        // Predicated region
        $region13: #{vit_zoo_forward.1} parent=11 // pred_check
          %p504 = pneg %p80
        $region14: #{vit_zoo_forward.1} parent=11 // pred_check_branch
          %506 = sbr.rel (%p504) target = $region16
        $region15: #{vit_zoo_forward.1} parent=11 // pred_region
          _
        $region16: #{vit_zoo_forward.1} parent=11 // pred_fallthru
          _
        // Predicated region
        $region17: #{vit_zoo_forward.1} parent=11 // pred_check
          %p507 = pneg %p101
        $region18: #{vit_zoo_forward.1} parent=11 // pred_check_branch
          %509 = sbr.rel (%p507) target = $region20
        $region19: #{vit_zoo_forward.1} parent=11 // pred_region
          _
        $region20: #{vit_zoo_forward.1} parent=11 // pred_fallthru
          _
        // Predicated region
        $region21: #{vit_zoo_forward.1} parent=11 // pred_check
          %p510 = pneg %p122
        $region22: #{vit_zoo_forward.1} parent=11 // pred_check_branch
          %512 = sbr.rel (%p510) target = $region24
        $region23: #{vit_zoo_forward.1} parent=11 // pred_region
          _
        $region24: #{vit_zoo_forward.1} parent=11 // pred_fallthru
          _
        // Predicated region
        $region25: #{vit_zoo_forward.1} parent=11 // pred_check
          %p513 = pneg %p143
        $region26: #{vit_zoo_forward.1} parent=11 // pred_check_branch
          %515 = sbr.rel (%p513) target = $region28
        $region27: #{vit_zoo_forward.1} parent=11 // pred_region
          _
        $region28: #{vit_zoo_forward.1} parent=11 // pred_fallthru
          _
        // Predicated region
        $region29: #{vit_zoo_forward.1} parent=11 // pred_check
          %p516 = pneg %p164
        $region30: #{vit_zoo_forward.1} parent=11 // pred_check_branch
          %518 = sbr.rel (%p516) target = $region32
        $region31: #{vit_zoo_forward.1} parent=11 // pred_region
          _
        $region32: #{vit_zoo_forward.1} parent=11 // pred_fallthru
          _
        // Predicated region
        $region33: #{vit_zoo_forward.1} parent=11 // pred_check
          %p519 = pneg %p185
        $region34: #{vit_zoo_forward.1} parent=11 // pred_check_branch
          %521 = sbr.rel (%p519) target = $region36
        $region35: #{vit_zoo_forward.1} parent=11 // pred_region
          _
        $region36: #{vit_zoo_forward.1} parent=11 // pred_fallthru
          _
        // Predicated region
        $region37: #{vit_zoo_forward.1} parent=11 // pred_check
          %p522 = pneg %p206
        $region38: #{vit_zoo_forward.1} parent=11 // pred_check_branch
          %524 = sbr.rel (%p522) target = $region40
        $region39: #{vit_zoo_forward.1} parent=11 // pred_region
          _
        $region40: #{vit_zoo_forward.1} parent=11 // pred_fallthru
          _
        // Predicated region
        $region41: #{vit_zoo_forward.1} parent=11 // pred_check
          %p525 = pneg %p227
        $region42: #{vit_zoo_forward.1} parent=11 // pred_check_branch
          %527 = sbr.rel (%p525) target = $region44
        $region43: #{vit_zoo_forward.1} parent=11 // pred_region
          _
        $region44: #{vit_zoo_forward.1} parent=11 // pred_fallthru
          _
        // Predicated region
        $region45: #{vit_zoo_forward.1} parent=11 // pred_check
          %p528 = pneg %p248
        $region46: #{vit_zoo_forward.1} parent=11 // pred_check_branch
          %530 = sbr.rel (%p528) target = $region48
        $region47: #{vit_zoo_forward.1} parent=11 // pred_region
          _
        $region48: #{vit_zoo_forward.1} parent=11 // pred_fallthru
          _
        // Predicated region
        $region49: #{vit_zoo_forward.1} parent=11 // pred_check
          %p531 = pneg %p269
        $region50: #{vit_zoo_forward.1} parent=11 // pred_check_branch
          %533 = sbr.rel (%p531) target = $region52
        $region51: #{vit_zoo_forward.1} parent=11 // pred_region
          _
        $region52: #{vit_zoo_forward.1} parent=11 // pred_fallthru
          _
        // Predicated region
        $region53: #{vit_zoo_forward.1} parent=11 // pred_check
          %p534 = pneg %p290
        $region54: #{vit_zoo_forward.1} parent=11 // pred_check_branch
          %536 = sbr.rel (%p534) target = $region56
        $region55: #{vit_zoo_forward.1} parent=11 // pred_region
          _
        $region56: #{vit_zoo_forward.1} parent=11 // pred_fallthru
          _
        // Predicated region
        $region57: #{vit_zoo_forward.1} parent=11 // pred_check
          %p537 = pneg %p311
        $region58: #{vit_zoo_forward.1} parent=11 // pred_check_branch
          %539 = sbr.rel (%p537) target = $region60
        $region59: #{vit_zoo_forward.1} parent=11 // pred_region
          _
        $region60: #{vit_zoo_forward.1} parent=11 // pred_fallthru
          _
        // Predicated region
        $region61: #{vit_zoo_forward.1} parent=11 // pred_check
          %p540 = pneg %p332
        $region62: #{vit_zoo_forward.1} parent=11 // pred_check_branch
          %542 = sbr.rel (%p540) target = $region64
        $region63: #{vit_zoo_forward.1} parent=11 // pred_region
          _
        $region64: #{vit_zoo_forward.1} parent=11 // pred_fallthru
          _
        // Predicated region
        $region65: #{vit_zoo_forward.1} parent=11 // pred_check
          %p543 = pneg %p353
        $region66: #{vit_zoo_forward.1} parent=11 // pred_check_branch
          %545 = sbr.rel (%p543) target = $region68
        $region67: #{vit_zoo_forward.1} parent=11 // pred_region
          _
        $region68: #{vit_zoo_forward.1} parent=11 // pred_fallthru
          _
        // Predicated region
        $region69: #{vit_zoo_forward.1} parent=11 // pred_check
          %p546 = pneg %p374
        $region70: #{vit_zoo_forward.1} parent=11 // pred_check_branch
          %548 = sbr.rel (%p546) target = $region72
        $region71: #{vit_zoo_forward.1} parent=11 // pred_region
          _
        $region72: #{vit_zoo_forward.1} parent=11 // pred_fallthru
          _
        // Predicated region
        $region73: #{vit_zoo_forward.1} parent=11 // pred_check
          %p549 = pneg %p395
        $region74: #{vit_zoo_forward.1} parent=11 // pred_check_branch
          %551 = sbr.rel (%p549) target = $region76
        $region75: #{vit_zoo_forward.1} parent=11 // pred_region
          _
        $region76: #{vit_zoo_forward.1} parent=11 // pred_fallthru
          _
        // Predicated region
        $region77: #{vit_zoo_forward.1} parent=11 // pred_check
          %p552 = pneg %p416
        $region78: #{vit_zoo_forward.1} parent=11 // pred_check_branch
          %554 = sbr.rel (%p552) target = $region80
        $region79: #{vit_zoo_forward.1} parent=11 // pred_region
          _
        $region80: #{vit_zoo_forward.1} parent=11 // pred_fallthru
          _
        // Predicated region
        $region81: #{vit_zoo_forward.1} parent=11 // pred_check
          %p555 = pneg %p437
        $region82: #{vit_zoo_forward.1} parent=11 // pred_check_branch
          %557 = sbr.rel (%p555) target = $region84
        $region83: #{vit_zoo_forward.1} parent=11 // pred_region
          _
        $region84: #{vit_zoo_forward.1} parent=11 // pred_fallthru
          _
      $region12: #{vit_zoo_forward.1} parent=5 // pred_fallthru
        _
      %p558 = scmp.lt.s32.totalorder %s33, 2
      // Predicated region
      $region85: #{vit_zoo_forward.1} parent=5 // pred_check
        %p559 = pneg %p558
      $region86: #{vit_zoo_forward.1} parent=5 // pred_check_branch
        %561 = sbr.rel (%p559) target = $region88
      $region87: #{vit_zoo_forward.1} parent=5 // pred_region
        // Predicated region
        $region89: #{vit_zoo_forward.1} parent=87 // pred_check
          %p562 = pneg %p53
        $region90: #{vit_zoo_forward.1} parent=87 // pred_check_branch
          %564 = sbr.rel (%p562) target = $region92
        $region91: #{vit_zoo_forward.1} parent=87 // pred_region
          %p565 = scmp.lt.s32.totalorder %s33, 1
          %s566 = scalar_select %p565, %s33, 1
          %s567 = smul.addr %s566, 6
          %s568 = smul.addr %s567, 8
          %s569 = scalar_lea.vmem %s0, %s568
        $region92: #{vit_zoo_forward.1} parent=87 // pred_fallthru
          _
      $region88: #{vit_zoo_forward.1} parent=5 // pred_fallthru
        _
      %p570 = scmp.le.s32.totalorder 1, %s33
      %p571 = scmp.lt.s32.totalorder %s33, 3
      %p572 = pnand %p570, %p571
      %p573 = pneg %p572
      // Predicated region
      $region93: #{vit_zoo_forward.1} parent=5 // pred_check
        _
      $region94: #{vit_zoo_forward.1} parent=5 // pred_check_branch
        %575 = sbr.rel (%p572) target = $region96
      $region95: #{vit_zoo_forward.1} parent=5 // pred_region
        %s576 = ssub.s32 %s33, 1
        %p577 = scmp.lt.s32.totalorder %s38, 1
        %s578 = scalar_select %p577, %s38, 1
        %s579 = smul.addr %s578, 6
        %s580 = smul.addr %s579, 8
        %s581 = scalar_lea.vmem %s0, %s580
        %p582 = pneg %p59
        %p583 = pneg %p56
        %p584 = pneg %p80
        %p585 = pneg %p77
        %p586 = pneg %p101
        %p587 = pneg %p98
        %p588 = pneg %p122
        %p589 = pneg %p119
        %p590 = pneg %p143
        %p591 = pneg %p140
        %p592 = pneg %p164
        %p593 = pneg %p161
        %p594 = pneg %p185
        %p595 = pneg %p182
        %p596 = pneg %p206
        %p597 = pneg %p203
        %p598 = pneg %p227
        %p599 = pneg %p224
        %p600 = pneg %p248
        %p601 = pneg %p245
        %p602 = pneg %p269
        %p603 = pneg %p266
        %p604 = pneg %p290
        %p605 = pneg %p287
        %p606 = pneg %p311
        %p607 = pneg %p308
        %p608 = pneg %p332
        %p609 = pneg %p329
        %p610 = pneg %p353
        %p611 = pneg %p350
        %p612 = pneg %p374
        %p613 = pneg %p371
        %p614 = pneg %p395
        %p615 = pneg %p392
        %p616 = pneg %p416
        %p617 = pneg %p413
        %p618 = pneg %p437
        %p619 = pneg %p434
        %p620 = pneg %p463
        %p621 = pneg %p460
        %s622 = sand.u32 %s450, 1
        %s623 = scalar_lea.sflag [#allocation3], %s622
        %s624 = sand.u32 %s450, 1
        %s625 = scalar_lea.vmem [#allocation2], %s624
        %p626 = pneg %p489
        %p627 = pneg %p486
        %s628 = sand.u32 %s476, 1
        %s629 = scalar_lea.sflag [#allocation5], %s628
        %s630 = sand.u32 %s476, 1
        %s631 = scalar_lea.vmem [#allocation4], %s630
        %p632 = scmp.lt.s32.totalorder %s38, 1
        %s633 = scalar_select %p632, %s38, 1
        %s634 = smul.addr %s633, 6
        %s635 = smul.addr %s634, 8
        %s636 = scalar_lea.vmem %s0, %s635
        %v637 = vld [vmem:[%s636] sm:$0xff]
        %v638 = vld [vmem:[%s636 + $0x8] sm:$0xff]
        %v639 = vld [vmem:[%s636 + $0x10] sm:$0xff]
        %v640 = vld [vmem:[%s636 + $0x18] sm:$0xff]
        %v641 = vld [vmem:[%s636 + $0x20] sm:$0xff]
        %v642 = vld [vmem:[%s636 + $0x28] sm:$0xff]
        %v643 = vld [vmem:[%s2] sm:$0xff]
        %v644 = vld [vmem:[%s2 + $0x8] sm:$0xff]
        %v645 = vld [vmem:[%s2 + $0x10] sm:$0xff]
        %v646 = vld [vmem:[%s2 + $0x18] sm:$0xff]
        %v647 = vld [vmem:[%s2 + $0x20] sm:$0xff]
        %v648 = vld [vmem:[%s2 + $0x28] sm:$0xff]
        %v649 = vld [vmem:[%s2 + $0x30] sm:$0xff]
        %v650 = vld [vmem:[%s2 + $0x38] sm:$0xff]
        %v651 = vld [vmem:[%s2 + $0x40] sm:$0xff]
        %v652 = vld [vmem:[%s2 + $0x48] sm:$0xff]
        %v653 = vld [vmem:[%s2 + $0x50] sm:$0xff]
        %v654 = vld [vmem:[%s2 + $0x58] sm:$0xff]
        %v655 = vld [vmem:[%s2 + $0x60] sm:$0xff]
        %v656 = vld [vmem:[%s2 + $0x68] sm:$0xff]
        %v657 = vld [vmem:[%s2 + $0x70] sm:$0xff]
        %v658 = vld [vmem:[%s2 + $0x78] sm:$0xff]
        %v659 = vld [vmem:[%s2 + $0x80] sm:$0xff]
        %v660 = vld [vmem:[%s2 + $0x88] sm:$0xff]
        %v661 = vld [vmem:[%s2 + $0x90] sm:$0xff]
        %v662 = vld [vmem:[%s2 + $0x98] sm:$0xff]
        %v663 = vld [vmem:[%s2 + $0xa0] sm:$0xff]
        %v664 = vld [vmem:[%s2 + $0xa8] sm:$0xff]
        %v665 = vld [vmem:[%s2 + $0xb0] sm:$0xff]
        %v666 = vld [vmem:[%s2 + $0xb8] sm:$0xff]
        %v667 = vld [vmem:[%s2 + $0xc0] sm:$0xff]
        %v668 = vld [vmem:[%s2 + $0xc8] sm:$0xff]
        %v669 = vld [vmem:[%s2 + $0xd0] sm:$0xff]
        %v670 = vld [vmem:[%s2 + $0xd8] sm:$0xff]
        %v671 = vld [vmem:[%s2 + $0xe0] sm:$0xff]
        %v672 = vld [vmem:[%s2 + $0xe8] sm:$0xff]
        %v673 = vld [vmem:[%s2 + $0xf0] sm:$0xff]
        %v674 = vld [vmem:[%s2 + $0xf8] sm:$0xff]
        %v675 = vld [vmem:[%s2 + $0x100] sm:$0xff]
        %v676 = vld [vmem:[%s2 + $0x108] sm:$0xff]
        %v677 = vld [vmem:[%s2 + $0x110] sm:$0xff]
        %v678 = vld [vmem:[%s2 + $0x118] sm:$0xff]
        %v679 = vld [vmem:[%s2 + $0x120] sm:$0xff]
        %v680 = vld [vmem:[%s2 + $0x128] sm:$0xff]
        %v681 = vld [vmem:[%s2 + $0x130] sm:$0xff]
        %v682 = vld [vmem:[%s2 + $0x138] sm:$0xff]
        %v683 = vld [vmem:[%s2 + $0x140] sm:$0xff]
        %v684 = vld [vmem:[%s2 + $0x148] sm:$0xff]
        %v685 = vld [vmem:[%s2 + $0x150] sm:$0xff]
        %v686 = vld [vmem:[%s2 + $0x158] sm:$0xff]
        %v687 = vld [vmem:[%s2 + $0x160] sm:$0xff]
        %v688 = vld [vmem:[%s2 + $0x168] sm:$0xff]
        %v689 = vld [vmem:[%s2 + $0x170] sm:$0xff]
        %v690 = vld [vmem:[%s2 + $0x178] sm:$0xff]
        %v691 = vld [vmem:[%s2 + $0x180] sm:$0xff]
        %v692 = vld [vmem:[%s2 + $0x188] sm:$0xff]
        %v693 = vld [vmem:[%s2 + $0x190] sm:$0xff]
        %v694 = vld [vmem:[%s2 + $0x198] sm:$0xff]
        %v695 = vld [vmem:[%s2 + $0x1a0] sm:$0xff]
        %v696 = vld [vmem:[%s2 + $0x1a8] sm:$0xff]
        %v697 = vld [vmem:[%s2 + $0x1b0] sm:$0xff]
        %v698 = vld [vmem:[%s2 + $0x1b8] sm:$0xff]
        %v699 = vld [vmem:[%s2 + $0x1c0] sm:$0xff]
        %v700 = vld [vmem:[%s2 + $0x1c8] sm:$0xff]
        %v701 = vld [vmem:[%s2 + $0x1d0] sm:$0xff]
        %v702 = vld [vmem:[%s2 + $0x1d8] sm:$0xff]
        %v703 = vld [vmem:[%s2 + $0x1e0] sm:$0xff]
        %v704 = vld [vmem:[%s2 + $0x1e8] sm:$0xff]
        %v705 = vld [vmem:[%s2 + $0x1f0] sm:$0xff]
        %v706 = vld [vmem:[%s2 + $0x1f8] sm:$0xff]
        %v707 = vld [vmem:[%s2 + $0x200] sm:$0xff]
        %v708 = vld [vmem:[%s2 + $0x208] sm:$0xff]
        %v709 = vld [vmem:[%s2 + $0x210] sm:$0xff]
        %v710 = vld [vmem:[%s2 + $0x218] sm:$0xff]
        %v711 = vld [vmem:[%s2 + $0x220] sm:$0xff]
        %v712 = vld [vmem:[%s2 + $0x228] sm:$0xff]
        %v713 = vld [vmem:[%s2 + $0x230] sm:$0xff]
        %v714 = vld [vmem:[%s2 + $0x238] sm:$0xff]
        %v715 = vld [vmem:[%s2 + $0x240] sm:$0xff]
        %v716 = vld [vmem:[%s2 + $0x248] sm:$0xff]
        %v717 = vld [vmem:[%s2 + $0x250] sm:$0xff]
        %v718 = vld [vmem:[%s2 + $0x258] sm:$0xff]
        %v719 = vld [vmem:[%s2 + $0x260] sm:$0xff]
        %v720 = vld [vmem:[%s2 + $0x268] sm:$0xff]
        %v721 = vld [vmem:[%s2 + $0x270] sm:$0xff]
        %v722 = vld [vmem:[%s2 + $0x278] sm:$0xff]
        %v723 = vld [vmem:[%s2 + $0x280] sm:$0xff]
        %v724 = vld [vmem:[%s2 + $0x288] sm:$0xff]
        %v725 = vld [vmem:[%s2 + $0x290] sm:$0xff]
        %v726 = vld [vmem:[%s2 + $0x298] sm:$0xff]
        %v727 = vld [vmem:[%s2 + $0x2a0] sm:$0xff]
        %v728 = vld [vmem:[%s2 + $0x2a8] sm:$0xff]
        %v729 = vld [vmem:[%s2 + $0x2b0] sm:$0xff]
        %v730 = vld [vmem:[%s2 + $0x2b8] sm:$0xff]
        %v731 = vld [vmem:[%s2 + $0x2c0] sm:$0xff]
        %v732 = vld [vmem:[%s2 + $0x2c8] sm:$0xff]
        %v733 = vld [vmem:[%s2 + $0x2d0] sm:$0xff]
        %v734 = vld [vmem:[%s2 + $0x2d8] sm:$0xff]
        %v735 = vld [vmem:[%s2 + $0x2e0] sm:$0xff]
        %v736 = vld [vmem:[%s2 + $0x2e8] sm:$0xff]
        %v737 = vld [vmem:[%s2 + $0x2f0] sm:$0xff]
        %v738 = vld [vmem:[%s2 + $0x2f8] sm:$0xff]
        %v739 = vld [vmem:[%s1] sm:$0xff]
        %740 = vmatpush.msra.mxu0 %v658
        %741 = vmatpush.msra.mxu0 %v657
        %742 = vmatpush.msra.mxu0 %v656
        %743 = vmatpush.msra.mxu0 %v655
        %744 = vmatpush.msra.mxu0 %v654
        %745 = vmatpush.msra.mxu0 %v653
        %746 = vmatpush.msra.mxu0 %v652
        %747 = vmatpush.msra.mxu0 %v651
        %748 = vmatpush.msra.mxu0 %v650
        %749 = vmatpush.msra.mxu0 %v649
        %750 = vmatpush.msra.mxu0 %v648
        %751 = vmatpush.msra.mxu0 %v647
        %752 = vmatpush.msra.mxu0 %v646
        %753 = vmatpush.msra.mxu0 %v645
        %754 = vmatpush.msra.mxu0 %v644
        %755 = vmatpush.msra.mxu0 %v643
        %756 = vmatmul.f32.gmra.mxu0 %v637
        %v757 = vpop.f32.mrf.mxu0
        %v758 = vadd.f32 %v739, %v757
        %759 = vdwg.mxu0
        %760 = vmatpush.msra.mxu0 %v674
        %761 = vmatpush.msra.mxu0 %v673
        %762 = vmatpush.msra.mxu0 %v672
        %763 = vmatpush.msra.mxu0 %v671
        %764 = vmatpush.msra.mxu0 %v670
        %765 = vmatpush.msra.mxu0 %v669
        %766 = vmatpush.msra.mxu0 %v668
        %767 = vmatpush.msra.mxu0 %v667
        %768 = vmatpush.msra.mxu0 %v666
        %769 = vmatpush.msra.mxu0 %v665
        %770 = vmatpush.msra.mxu0 %v664
        %771 = vmatpush.msra.mxu0 %v663
        %772 = vmatpush.msra.mxu0 %v662
        %773 = vmatpush.msra.mxu0 %v661
        %774 = vmatpush.msra.mxu0 %v660
        %775 = vmatpush.msra.mxu0 %v659
        %776 = vmatmul.f32.gmra.mxu0 %v638
        %v777 = vpop.f32.mrf.mxu0
        %v778 = vadd.f32 %v758, %v777
        %779 = vdwg.mxu0
        %780 = vmatpush.msra.mxu0 %v690
        %781 = vmatpush.msra.mxu0 %v689
        %782 = vmatpush.msra.mxu0 %v688
        %783 = vmatpush.msra.mxu0 %v687
        %784 = vmatpush.msra.mxu0 %v686
        %785 = vmatpush.msra.mxu0 %v685
        %786 = vmatpush.msra.mxu0 %v684
        %787 = vmatpush.msra.mxu0 %v683
        %788 = vmatpush.msra.mxu0 %v682
        %789 = vmatpush.msra.mxu0 %v681
        %790 = vmatpush.msra.mxu0 %v680
        %791 = vmatpush.msra.mxu0 %v679
        %792 = vmatpush.msra.mxu0 %v678
        %793 = vmatpush.msra.mxu0 %v677
        %794 = vmatpush.msra.mxu0 %v676
        %795 = vmatpush.msra.mxu0 %v675
        %796 = vmatmul.f32.gmra.mxu0 %v639
        %v797 = vpop.f32.mrf.mxu0
        %v798 = vadd.f32 %v778, %v797
        %799 = vdwg.mxu0
        %800 = vmatpush.msra.mxu0 %v706
        %801 = vmatpush.msra.mxu0 %v705
        %802 = vmatpush.msra.mxu0 %v704
        %803 = vmatpush.msra.mxu0 %v703
        %804 = vmatpush.msra.mxu0 %v702
        %805 = vmatpush.msra.mxu0 %v701
        %806 = vmatpush.msra.mxu0 %v700
        %807 = vmatpush.msra.mxu0 %v699
        %808 = vmatpush.msra.mxu0 %v698
        %809 = vmatpush.msra.mxu0 %v697
        %810 = vmatpush.msra.mxu0 %v696
        %811 = vmatpush.msra.mxu0 %v695
        %812 = vmatpush.msra.mxu0 %v694
        %813 = vmatpush.msra.mxu0 %v693
        %814 = vmatpush.msra.mxu0 %v692
        %815 = vmatpush.msra.mxu0 %v691
        %816 = vmatmul.f32.gmra.mxu0 %v640
        %v817 = vpop.f32.mrf.mxu0
        %v818 = vadd.f32 %v798, %v817
        %819 = vdwg.mxu0
        %820 = vmatpush.msra.mxu0 %v722
        %821 = vmatpush.msra.mxu0 %v721
        %822 = vmatpush.msra.mxu0 %v720
        %823 = vmatpush.msra.mxu0 %v719
        %824 = vmatpush.msra.mxu0 %v718
        %825 = vmatpush.msra.mxu0 %v717
        %826 = vmatpush.msra.mxu0 %v716
        %827 = vmatpush.msra.mxu0 %v715
        %828 = vmatpush.msra.mxu0 %v714
        %829 = vmatpush.msra.mxu0 %v713
        %830 = vmatpush.msra.mxu0 %v712
        %831 = vmatpush.msra.mxu0 %v711
        %832 = vmatpush.msra.mxu0 %v710
        %833 = vmatpush.msra.mxu0 %v709
        %834 = vmatpush.msra.mxu0 %v708
        %835 = vmatpush.msra.mxu0 %v707
        %836 = vmatmul.f32.gmra.mxu0 %v641
        %v837 = vpop.f32.mrf.mxu0
        %v838 = vadd.f32 %v818, %v837
        %839 = vdwg.mxu0
        %840 = vmatpush.msra.mxu0 %v738
        %841 = vmatpush.msra.mxu0 %v737
        %842 = vmatpush.msra.mxu0 %v736
        %843 = vmatpush.msra.mxu0 %v735
        %844 = vmatpush.msra.mxu0 %v734
        %845 = vmatpush.msra.mxu0 %v733
        %846 = vmatpush.msra.mxu0 %v732
        %847 = vmatpush.msra.mxu0 %v731
        %848 = vmatpush.msra.mxu0 %v730
        %849 = vmatpush.msra.mxu0 %v729
        %850 = vmatpush.msra.mxu0 %v728
        %851 = vmatpush.msra.mxu0 %v727
        %852 = vmatpush.msra.mxu0 %v726
        %853 = vmatpush.msra.mxu0 %v725
        %854 = vmatpush.msra.mxu0 %v724
        %855 = vmatpush.msra.mxu0 %v723
        %856 = vmatmul.f32.gmra.mxu0 %v642
        %v857 = vpop.f32.mrf.mxu0
        %v858 = vadd.f32 %v838, %v857
        %859 = vdwg.mxu0
        %v860 = vlaneseq
        %v861 = vand.u32 %v860, 127
        %vm862 = vcmp.ge.s32.totalorder %v861, 5
        %v863 = vsel %vm862, -1e+30, 0.0
        %v864 = vld [vmem:[%s3] sm:$0x1]
        %v865 = vld [vmem:[%s4] sm:$0x1]
        %vm866 = vcmask 261120
        %v867 = vsel %vm866, %v858, 0.0
        %868 = vadd.xlane.f32.xlu0 %v867
        %v869 = vpop.xlane.xlu0 %868
        %v870 = vrcp.pop 32.0
        %v871 = vmul.f32 32.0, %v870
        %v872 = vsub.f32 1.0, %v871
        %v873 = vmul.f32 %v870, %v872
        %v874 = vadd.f32 %v870, %v873
        %vm875 = vweird.f32 %v870
        %v876 = vsel %vm875, %v870, %v874
        %v877 = vmul.f32 %v869, %v876
        %v878 = vsub.f32 %v858, %v877
        %v879 = vmul.f32 %v878, %v878
        %v880 = vsel %vm866, %v879, 0.0
        %881 = vadd.xlane.f32.xlu0 %v880
        %v882 = vpop.xlane.xlu0 %881
        %v883 = vmul.f32 %v882, %v876
        %v884 = vadd.f32 %v883, 1e-06
        %v885 = vrsqrt.pop %v884
        %v886 = vmul.f32 %v885, %v884
        %v887 = vmul.f32 %v886, %v885
        %v888 = vmul.f32 0.5, %v887
        %v889 = vsub.f32 1.5, %v888
        %v890 = vmul.f32 %v885, %v889
        %vm891 = vweird.f32 %v884
        %vm892 = vweird.f32 %v885
        %vm893 = vmor %vm891, %vm892
        %v894 = vsel %vm893, %v885, %v890
        %v895 = vmul.f32 %v878, %v894
        %v897 = vperm.slane %v864, 0
        %v899 = vmul.f32 %v895, %v897
        %v901 = vperm.slane %v865, 0
        %v903 = vadd.f32 %v899, %v901
        %v904 = vld [vmem:[%s5] sm:$0xff]
        %v905 = vld [vmem:[%s5 + $0x8] sm:$0xff]
        %v906 = vld [vmem:[%s5 + $0x10] sm:$0xff]
        %v907 = vld [vmem:[%s5 + $0x18] sm:$0xff]
        %v908 = vld [vmem:[%s6] sm:$0x1]
        %v910 = vperm.slane %v908, 0
        %v913 = vsel %vm866, %v903, 0
        %915 = vmatpush.msra.mxu0 0.0
        %916 = vmatpush.msra.mxu0 0.0
        %917 = vmatpush.msra.mxu0 0.0
        %918 = vmatpush.msra.mxu0 0.0
        %919 = vmatpush.msra.mxu0 0.0
        %920 = vmatpush.msra.mxu0 0.0
        %921 = vmatpush.msra.mxu0 0.0
        %922 = vmatpush.msra.mxu0 0.0
        %923 = vmatpush.msra.mxu0 0.0
        %924 = vmatpush.msra.mxu0 0.0
        %925 = vmatpush.msra.mxu0 0.0
        %926 = vmatpush.msra.mxu0 0.0
        %927 = vmatpush.msra.mxu0 %v907
        %928 = vmatpush.msra.mxu0 %v906
        %929 = vmatpush.msra.mxu0 %v905
        %930 = vmatpush.msra.mxu0 %v904
        %931 = vmatmul.f32.gmra.mxu0 %v913
        %v932 = vpop.f32.mrf.mxu0
        %v933 = vadd.f32 %v910, %v932
        %934 = vdwg.mxu0
        %936 = vrot.lane.b32.xlu0 %v933, 96
        %v937 = vpop.permute.xlu0 %936
        %vm938 = vcmask 130048
        %v939 = vsel %vm938, %v933, 0
        %v941 = vsel %vm938, %v937, 0
        %943 = vmatpush.xpose.msra.mxu0 0.0
        %944 = vmatpush.xpose.msra.mxu0 0.0
        %945 = vmatpush.xpose.msra.mxu0 0.0
        %946 = vmatpush.xpose.msra.mxu0 0.0
        %947 = vmatpush.xpose.msra.mxu0 0.0
        %948 = vmatpush.xpose.msra.mxu0 0.0
        %949 = vmatpush.xpose.msra.mxu0 0.0
        %950 = vmatpush.xpose.msra.mxu0 0.0
        %951 = vmatpush.xpose.msra.mxu0 0.0
        %952 = vmatpush.xpose.msra.mxu0 0.0
        %953 = vmatpush.xpose.msra.mxu0 0.0
        %954 = vmatpush.xpose.msra.mxu0 0.0
        %955 = vmatpush.xpose.msra.mxu0 0.0
        %956 = vmatpush.xpose.msra.mxu0 0.0
        %957 = vmatpush.xpose.msra.mxu0 0.0
        %958 = vmatpush.xpose.msra.mxu0 %v941
        %959 = vmatmul.f32.gmra.mxu0 %v939
        %v960 = vpop.f32.mrf.mxu0
        %v961 = vadd.f32 0.0, %v960
        %962 = vdwg.mxu0
        %v963 = vmul.f32 %v961, 0.25
        %v964 = vadd.f32 %v963, %v863
        %vm965 = vcmask 64512
        %v966 = vsel %vm965, %v964, -inf
        %967 = vmax.xlane.f32.xlu0 %v966
        %v968 = vpop.xlane.xlu0 %967
        %v969 = vsub.f32 %v964, %v968
        %v970 = vmul.f32 %v969, 1.442695
        %v971 = vpow.pop %v970
        %v972 = vsel %vm965, %v971, 0.0
        %973 = vadd.xlane.f32.xlu0 %v972
        %v974 = vpop.xlane.xlu0 %973
        %v975 = vrcp.pop %v974
        %v976 = vmul.f32 %v971, %v975
        %977 = vrot.lane.b32.xlu0 %v933, 64
        %v978 = vpop.permute.xlu0 %977
        %v981 = vsel %vm965, %v976, 0
        %983 = vmatpush.msra.mxu0 0.0
        %984 = vmatpush.msra.mxu0 0.0
        %985 = vmatpush.msra.mxu0 0.0
        %986 = vmatpush.msra.mxu0 0.0
        %987 = vmatpush.msra.mxu0 0.0
        %988 = vmatpush.msra.mxu0 0.0
        %989 = vmatpush.msra.mxu0 0.0
        %990 = vmatpush.msra.mxu0 0.0
        %991 = vmatpush.msra.mxu0 0.0
        %992 = vmatpush.msra.mxu0 0.0
        %993 = vmatpush.msra.mxu0 0.0
        %994 = vmatpush.msra.mxu0 0.0
        %995 = vmatpush.msra.mxu0 0.0
        %996 = vmatpush.msra.mxu0 0.0
        %997 = vmatpush.msra.mxu0 0.0
        %998 = vmatpush.msra.mxu0 %v978
        %999 = vmatmul.f32.gmra.mxu0 %v981
        %v1000 = vpop.f32.mrf.mxu0
        %v1001 = vadd.f32 0.0, %v1000
        %1002 = vdwg.mxu0
        %1003 = vrot.lane.b32.xlu0 %v933, 112
        %v1004 = vpop.permute.xlu0 %1003
        %1005 = vrot.lane.b32.xlu0 %v933, 80
        %v1006 = vpop.permute.xlu0 %1005
        %v1007 = vsel %vm938, %v1004, 0
        %v1009 = vsel %vm938, %v1006, 0
        %1011 = vmatpush.xpose.msra.mxu0 0.0
        %1012 = vmatpush.xpose.msra.mxu0 0.0
        %1013 = vmatpush.xpose.msra.mxu0 0.0
        %1014 = vmatpush.xpose.msra.mxu0 0.0
        %1015 = vmatpush.xpose.msra.mxu0 0.0
        %1016 = vmatpush.xpose.msra.mxu0 0.0
        %1017 = vmatpush.xpose.msra.mxu0 0.0
        %1018 = vmatpush.xpose.msra.mxu0 0.0
        %1019 = vmatpush.xpose.msra.mxu0 0.0
        %1020 = vmatpush.xpose.msra.mxu0 0.0
        %1021 = vmatpush.xpose.msra.mxu0 0.0
        %1022 = vmatpush.xpose.msra.mxu0 0.0
        %1023 = vmatpush.xpose.msra.mxu0 0.0
        %1024 = vmatpush.xpose.msra.mxu0 0.0
        %1025 = vmatpush.xpose.msra.mxu0 0.0
        %1026 = vmatpush.xpose.msra.mxu0 %v1009
        %1027 = vmatmul.f32.gmra.mxu0 %v1007
        %v1028 = vpop.f32.mrf.mxu0
        %v1029 = vadd.f32 0.0, %v1028
        %1030 = vdwg.mxu0
        %v1031 = vmul.f32 %v1029, 0.25
        %v1032 = vadd.f32 %v1031, %v863
        %v1033 = vsel %vm965, %v1032, -inf
        %1034 = vmax.xlane.f32.xlu0 %v1033
        %v1035 = vpop.xlane.xlu0 %1034
        %v1036 = vsub.f32 %v1032, %v1035
        %v1037 = vmul.f32 %v1036, 1.442695
        %v1038 = vpow.pop %v1037
        %v1039 = vsel %vm965, %v1038, 0.0
        %1040 = vadd.xlane.f32.xlu0 %v1039
        %v1041 = vpop.xlane.xlu0 %1040
        %v1042 = vrcp.pop %v1041
        %v1043 = vmul.f32 %v1038, %v1042
        %1044 = vrot.lane.b32.xlu0 %v933, 48
        %v1045 = vpop.permute.xlu0 %1044
        %v1048 = vsel %vm965, %v1043, 0
        %1050 = vmatpush.msra.mxu0 0.0
        %1051 = vmatpush.msra.mxu0 0.0
        %1052 = vmatpush.msra.mxu0 0.0
        %1053 = vmatpush.msra.mxu0 0.0
        %1054 = vmatpush.msra.mxu0 0.0
        %1055 = vmatpush.msra.mxu0 0.0
        %1056 = vmatpush.msra.mxu0 0.0
        %1057 = vmatpush.msra.mxu0 0.0
        %1058 = vmatpush.msra.mxu0 0.0
        %1059 = vmatpush.msra.mxu0 0.0
        %1060 = vmatpush.msra.mxu0 0.0
        %1061 = vmatpush.msra.mxu0 0.0
        %1062 = vmatpush.msra.mxu0 0.0
        %1063 = vmatpush.msra.mxu0 0.0
        %1064 = vmatpush.msra.mxu0 0.0
        %1065 = vmatpush.msra.mxu0 %v1045
        %1066 = vmatmul.f32.gmra.mxu0 %v1048
        %v1067 = vpop.f32.mrf.mxu0
        %v1068 = vadd.f32 0.0, %v1067
        %1069 = vdwg.mxu0
        %1071 = vrot.lane.b32.xlu0 %v1068, 16
        %v1072 = vpop.permute.xlu0 %1071
        %v1074 = vsel %vm938, %v1001, %v1072
        %v1075 = vld [vmem:[%s7] sm:$0xff]
        %v1076 = vld [vmem:[%s7 + $0x8] sm:$0xff]
        %v1077 = vld [vmem:[%s7 + $0x10] sm:$0xff]
        %v1078 = vld [vmem:[%s7 + $0x18] sm:$0xff]
        %v1079 = vld [vmem:[%s8] sm:$0x1]
        %v1081 = vperm.slane %v1079, 0
        %v1084 = vsel %vm866, %v1074, 0
        %1086 = vmatpush.msra.mxu0 0.0
        %1087 = vmatpush.msra.mxu0 0.0
        %1088 = vmatpush.msra.mxu0 0.0
        %1089 = vmatpush.msra.mxu0 0.0
        %1090 = vmatpush.msra.mxu0 0.0
        %1091 = vmatpush.msra.mxu0 0.0
        %1092 = vmatpush.msra.mxu0 0.0
        %1093 = vmatpush.msra.mxu0 0.0
        %1094 = vmatpush.msra.mxu0 0.0
        %1095 = vmatpush.msra.mxu0 0.0
        %1096 = vmatpush.msra.mxu0 0.0
        %1097 = vmatpush.msra.mxu0 0.0
        %1098 = vmatpush.msra.mxu0 %v1078
        %1099 = vmatpush.msra.mxu0 %v1077
        %1100 = vmatpush.msra.mxu0 %v1076
        %1101 = vmatpush.msra.mxu0 %v1075
        %1102 = vmatmul.f32.gmra.mxu0 %v1084
        %v1103 = vpop.f32.mrf.mxu0
        %v1104 = vadd.f32 %v1081, %v1103
        %1105 = vdwg.mxu0
        %v1106 = vadd.f32 %v858, %v1104
        %v1107 = vld [vmem:[%s9] sm:$0x1]
        %v1108 = vld [vmem:[%s10] sm:$0x1]
        %v1109 = vsel %vm866, %v1106, 0.0
        %1110 = vadd.xlane.f32.xlu0 %v1109
        %v1111 = vpop.xlane.xlu0 %1110
        %v1112 = vmul.f32 %v1111, %v876
        %v1113 = vsub.f32 %v1106, %v1112
        %v1114 = vmul.f32 %v1113, %v1113
        %v1115 = vsel %vm866, %v1114, 0.0
        %1116 = vadd.xlane.f32.xlu0 %v1115
        %v1117 = vpop.xlane.xlu0 %1116
        %v1118 = vmul.f32 %v1117, %v876
        %v1119 = vadd.f32 %v1118, 1e-06
        %v1120 = vrsqrt.pop %v1119
        %v1121 = vmul.f32 %v1120, %v1119
        %v1122 = vmul.f32 %v1121, %v1120
        %v1123 = vmul.f32 0.5, %v1122
        %v1124 = vsub.f32 1.5, %v1123
        %v1125 = vmul.f32 %v1120, %v1124
        %vm1126 = vweird.f32 %v1119
        %vm1127 = vweird.f32 %v1120
        %vm1128 = vmor %vm1126, %vm1127
        %v1129 = vsel %vm1128, %v1120, %v1125
        %v1130 = vmul.f32 %v1113, %v1129
        %v1132 = vperm.slane %v1107, 0
        %v1134 = vmul.f32 %v1130, %v1132
        %v1136 = vperm.slane %v1108, 0
        %v1138 = vadd.f32 %v1134, %v1136
        %v1139 = vld [vmem:[%s11] sm:$0xff]
        %v1140 = vld [vmem:[%s11 + $0x8] sm:$0xff]
        %v1141 = vld [vmem:[%s11 + $0x10] sm:$0xff]
        %v1142 = vld [vmem:[%s11 + $0x18] sm:$0xff]
        %v1143 = vld [vmem:[%s12] sm:$0x1]
        %v1145 = vperm.slane %v1143, 0
        %v1148 = vsel %vm866, %v1138, 0
        %1150 = vmatpush.msra.mxu0 0.0
        %1151 = vmatpush.msra.mxu0 0.0
        %1152 = vmatpush.msra.mxu0 0.0
        %1153 = vmatpush.msra.mxu0 0.0
        %1154 = vmatpush.msra.mxu0 0.0
        %1155 = vmatpush.msra.mxu0 0.0
        %1156 = vmatpush.msra.mxu0 0.0
        %1157 = vmatpush.msra.mxu0 0.0
        %1158 = vmatpush.msra.mxu0 0.0
        %1159 = vmatpush.msra.mxu0 0.0
        %1160 = vmatpush.msra.mxu0 0.0
        %1161 = vmatpush.msra.mxu0 0.0
        %1162 = vmatpush.msra.mxu0 %v1142
        %1163 = vmatpush.msra.mxu0 %v1141
        %1164 = vmatpush.msra.mxu0 %v1140
        %1165 = vmatpush.msra.mxu0 %v1139
        %1166 = vmatmul.f32.gmra.mxu0 %v1148
        %v1167 = vpop.f32.mrf.mxu0
        %v1168 = vadd.f32 %v1145, %v1167
        %1169 = vdwg.mxu0
        %v1170 = vmul.f32 %v1168, %v1168
        %v1171 = vmul.f32 %v1168, %v1170
        %v1172 = vmul.f32 %v1171, 0.044715
        %v1173 = vadd.f32 %v1168, %v1172
        %v1174 = vmul.f32 %v1173, 0.7978846
        %v1175 = vtanh.pop %v1174
        %v1176 = vadd.f32 %v1175, 1.0
        %v1177 = vmul.f32 %v1176, 0.5
        %v1178 = vmul.f32 %v1168, %v1177
        %v1179 = vld [vmem:[%s13] sm:$0xff]
        %v1180 = vld [vmem:[%s13 + $0x8] sm:$0xff]
        %v1181 = vld [vmem:[%s13 + $0x10] sm:$0xff]
        %v1182 = vld [vmem:[%s13 + $0x18] sm:$0xff]
        %v1183 = vld [vmem:[%s13 + $0x20] sm:$0xff]
        %v1184 = vld [vmem:[%s13 + $0x28] sm:$0xff]
        %v1185 = vld [vmem:[%s13 + $0x30] sm:$0xff]
        %v1186 = vld [vmem:[%s13 + $0x38] sm:$0xff]
        %v1187 = vld [vmem:[%s13 + $0x40] sm:$0xff]
        %v1188 = vld [vmem:[%s13 + $0x48] sm:$0xff]
        %v1189 = vld [vmem:[%s13 + $0x50] sm:$0xff]
        %v1190 = vld [vmem:[%s13 + $0x58] sm:$0xff]
        %v1191 = vld [vmem:[%s13 + $0x60] sm:$0xff]
        %v1192 = vld [vmem:[%s13 + $0x68] sm:$0xff]
        %v1193 = vld [vmem:[%s13 + $0x70] sm:$0xff]
        %v1194 = vld [vmem:[%s13 + $0x78] sm:$0xff]
        %v1195 = vld [vmem:[%s14] sm:$0x1]
        %v1197 = vperm.slane %v1195, 0
        %1199 = vmatpush.msra.mxu0 %v1194
        %1200 = vmatpush.msra.mxu0 %v1193
        %1201 = vmatpush.msra.mxu0 %v1192
        %1202 = vmatpush.msra.mxu0 %v1191
        %1203 = vmatpush.msra.mxu0 %v1190
        %1204 = vmatpush.msra.mxu0 %v1189
        %1205 = vmatpush.msra.mxu0 %v1188
        %1206 = vmatpush.msra.mxu0 %v1187
        %1207 = vmatpush.msra.mxu0 %v1186
        %1208 = vmatpush.msra.mxu0 %v1185
        %1209 = vmatpush.msra.mxu0 %v1184
        %1210 = vmatpush.msra.mxu0 %v1183
        %1211 = vmatpush.msra.mxu0 %v1182
        %1212 = vmatpush.msra.mxu0 %v1181
        %1213 = vmatpush.msra.mxu0 %v1180
        %1214 = vmatpush.msra.mxu0 %v1179
        %1215 = vmatmul.f32.gmra.mxu0 %v1178
        %v1216 = vpop.f32.mrf.mxu0
        %v1217 = vadd.f32 %v1197, %v1216
        %1218 = vdwg.mxu0
        %v1219 = vadd.f32 %v1106, %v1217
        %s1220 = scalar_lea.vmem %s3, 1
        %v1221 = vld [vmem:[%s1220] sm:$0x1]
        %s1222 = scalar_lea.vmem %s4, 1
        %v1223 = vld [vmem:[%s1222] sm:$0x1]
        %v1224 = vsel %vm866, %v1219, 0.0
        %1225 = vadd.xlane.f32.xlu0 %v1224
        %v1226 = vpop.xlane.xlu0 %1225
        %v1227 = vmul.f32 %v1226, %v876
        %v1228 = vsub.f32 %v1219, %v1227
        %v1229 = vmul.f32 %v1228, %v1228
        %v1230 = vsel %vm866, %v1229, 0.0
        %1231 = vadd.xlane.f32.xlu0 %v1230
        %v1232 = vpop.xlane.xlu0 %1231
        %v1233 = vmul.f32 %v1232, %v876
        %v1234 = vadd.f32 %v1233, 1e-06
        %v1235 = vrsqrt.pop %v1234
        %v1236 = vmul.f32 %v1235, %v1234
        %v1237 = vmul.f32 %v1236, %v1235
        %v1238 = vmul.f32 0.5, %v1237
        %v1239 = vsub.f32 1.5, %v1238
        %v1240 = vmul.f32 %v1235, %v1239
        %vm1241 = vweird.f32 %v1234
        %vm1242 = vweird.f32 %v1235
        %vm1243 = vmor %vm1241, %vm1242
        %v1244 = vsel %vm1243, %v1235, %v1240
        %v1245 = vmul.f32 %v1228, %v1244
        %v1247 = vperm.slane %v1221, 0
        %v1249 = vmul.f32 %v1245, %v1247
        %v1251 = vperm.slane %v1223, 0
        %v1253 = vadd.f32 %v1249, %v1251
        %s1254 = scalar_lea.vmem %s5, 32
        %v1255 = vld [vmem:[%s1254] sm:$0xff]
        %v1256 = vld [vmem:[%s1254 + $0x8] sm:$0xff]
        %v1257 = vld [vmem:[%s1254 + $0x10] sm:$0xff]
        %v1258 = vld [vmem:[%s1254 + $0x18] sm:$0xff]
        %s1259 = scalar_lea.vmem %s6, 1
        %v1260 = vld [vmem:[%s1259] sm:$0x1]
        %v1262 = vperm.slane %v1260, 0
        %v1265 = vsel %vm866, %v1253, 0
        %1267 = vmatpush.msra.mxu0 0.0
        %1268 = vmatpush.msra.mxu0 0.0
        %1269 = vmatpush.msra.mxu0 0.0
        %1270 = vmatpush.msra.mxu0 0.0
        %1271 = vmatpush.msra.mxu0 0.0
        %1272 = vmatpush.msra.mxu0 0.0
        %1273 = vmatpush.msra.mxu0 0.0
        %1274 = vmatpush.msra.mxu0 0.0
        %1275 = vmatpush.msra.mxu0 0.0
        %1276 = vmatpush.msra.mxu0 0.0
        %1277 = vmatpush.msra.mxu0 0.0
        %1278 = vmatpush.msra.mxu0 0.0
        %1279 = vmatpush.msra.mxu0 %v1258
        %1280 = vmatpush.msra.mxu0 %v1257
        %1281 = vmatpush.msra.mxu0 %v1256
        %1282 = vmatpush.msra.mxu0 %v1255
        %1283 = vmatmul.f32.gmra.mxu0 %v1265
        %v1284 = vpop.f32.mrf.mxu0
        %v1285 = vadd.f32 %v1262, %v1284
        %1286 = vdwg.mxu0
        %1288 = vrot.lane.b32.xlu0 %v1285, 96
        %v1289 = vpop.permute.xlu0 %1288
        %v1290 = vsel %vm938, %v1285, 0
        %v1292 = vsel %vm938, %v1289, 0
        %1294 = vmatpush.xpose.msra.mxu0 0.0
        %1295 = vmatpush.xpose.msra.mxu0 0.0
        %1296 = vmatpush.xpose.msra.mxu0 0.0
        %1297 = vmatpush.xpose.msra.mxu0 0.0
        %1298 = vmatpush.xpose.msra.mxu0 0.0
        %1299 = vmatpush.xpose.msra.mxu0 0.0
        %1300 = vmatpush.xpose.msra.mxu0 0.0
        %1301 = vmatpush.xpose.msra.mxu0 0.0
        %1302 = vmatpush.xpose.msra.mxu0 0.0
        %1303 = vmatpush.xpose.msra.mxu0 0.0
        %1304 = vmatpush.xpose.msra.mxu0 0.0
        %1305 = vmatpush.xpose.msra.mxu0 0.0
        %1306 = vmatpush.xpose.msra.mxu0 0.0
        %1307 = vmatpush.xpose.msra.mxu0 0.0
        %1308 = vmatpush.xpose.msra.mxu0 0.0
        %1309 = vmatpush.xpose.msra.mxu0 %v1292
        %1310 = vmatmul.f32.gmra.mxu0 %v1290
        %v1311 = vpop.f32.mrf.mxu0
        %v1312 = vadd.f32 0.0, %v1311
        %1313 = vdwg.mxu0
        %v1314 = vmul.f32 %v1312, 0.25
        %v1315 = vadd.f32 %v1314, %v863
        %v1316 = vsel %vm965, %v1315, -inf
        %1317 = vmax.xlane.f32.xlu0 %v1316
        %v1318 = vpop.xlane.xlu0 %1317
        %v1319 = vsub.f32 %v1315, %v1318
        %v1320 = vmul.f32 %v1319, 1.442695
        %v1321 = vpow.pop %v1320
        %v1322 = vsel %vm965, %v1321, 0.0
        %1323 = vadd.xlane.f32.xlu0 %v1322
        %v1324 = vpop.xlane.xlu0 %1323
        %v1325 = vrcp.pop %v1324
        %v1326 = vmul.f32 %v1321, %v1325
        %1327 = vrot.lane.b32.xlu0 %v1285, 64
        %v1328 = vpop.permute.xlu0 %1327
        %v1331 = vsel %vm965, %v1326, 0
        %1333 = vmatpush.msra.mxu0 0.0
        %1334 = vmatpush.msra.mxu0 0.0
        %1335 = vmatpush.msra.mxu0 0.0
        %1336 = vmatpush.msra.mxu0 0.0
        %1337 = vmatpush.msra.mxu0 0.0
        %1338 = vmatpush.msra.mxu0 0.0
        %1339 = vmatpush.msra.mxu0 0.0
        %1340 = vmatpush.msra.mxu0 0.0
        %1341 = vmatpush.msra.mxu0 0.0
        %1342 = vmatpush.msra.mxu0 0.0
        %1343 = vmatpush.msra.mxu0 0.0
        %1344 = vmatpush.msra.mxu0 0.0
        %1345 = vmatpush.msra.mxu0 0.0
        %1346 = vmatpush.msra.mxu0 0.0
        %1347 = vmatpush.msra.mxu0 0.0
        %1348 = vmatpush.msra.mxu0 %v1328
        %1349 = vmatmul.f32.gmra.mxu0 %v1331
        %v1350 = vpop.f32.mrf.mxu0
        %v1351 = vadd.f32 0.0, %v1350
        %1352 = vdwg.mxu0
        %1353 = vrot.lane.b32.xlu0 %v1285, 112
        %v1354 = vpop.permute.xlu0 %1353
        %1355 = vrot.lane.b32.xlu0 %v1285, 80
        %v1356 = vpop.permute.xlu0 %1355
        %v1357 = vsel %vm938, %v1354, 0
        %v1359 = vsel %vm938, %v1356, 0
        %1361 = vmatpush.xpose.msra.mxu0 0.0
        %1362 = vmatpush.xpose.msra.mxu0 0.0
        %1363 = vmatpush.xpose.msra.mxu0 0.0
        %1364 = vmatpush.xpose.msra.mxu0 0.0
        %1365 = vmatpush.xpose.msra.mxu0 0.0
        %1366 = vmatpush.xpose.msra.mxu0 0.0
        %1367 = vmatpush.xpose.msra.mxu0 0.0
        %1368 = vmatpush.xpose.msra.mxu0 0.0
        %1369 = vmatpush.xpose.msra.mxu0 0.0
        %1370 = vmatpush.xpose.msra.mxu0 0.0
        %1371 = vmatpush.xpose.msra.mxu0 0.0
        %1372 = vmatpush.xpose.msra.mxu0 0.0
        %1373 = vmatpush.xpose.msra.mxu0 0.0
        %1374 = vmatpush.xpose.msra.mxu0 0.0
        %1375 = vmatpush.xpose.msra.mxu0 0.0
        %1376 = vmatpush.xpose.msra.mxu0 %v1359
        %1377 = vmatmul.f32.gmra.mxu0 %v1357
        %v1378 = vpop.f32.mrf.mxu0
        %v1379 = vadd.f32 0.0, %v1378
        %1380 = vdwg.mxu0
        %v1381 = vmul.f32 %v1379, 0.25
        %v1382 = vadd.f32 %v1381, %v863
        %v1383 = vsel %vm965, %v1382, -inf
        %1384 = vmax.xlane.f32.xlu0 %v1383
        %v1385 = vpop.xlane.xlu0 %1384
        %v1386 = vsub.f32 %v1382, %v1385
        %v1387 = vmul.f32 %v1386, 1.442695
        %v1388 = vpow.pop %v1387
        %v1389 = vsel %vm965, %v1388, 0.0
        %1390 = vadd.xlane.f32.xlu0 %v1389
        %v1391 = vpop.xlane.xlu0 %1390
        %v1392 = vrcp.pop %v1391
        %v1393 = vmul.f32 %v1388, %v1392
        %1394 = vrot.lane.b32.xlu0 %v1285, 48
        %v1395 = vpop.permute.xlu0 %1394
        %v1398 = vsel %vm965, %v1393, 0
        %1400 = vmatpush.msra.mxu0 0.0
        %1401 = vmatpush.msra.mxu0 0.0
        %1402 = vmatpush.msra.mxu0 0.0
        %1403 = vmatpush.msra.mxu0 0.0
        %1404 = vmatpush.msra.mxu0 0.0
        %1405 = vmatpush.msra.mxu0 0.0
        %1406 = vmatpush.msra.mxu0 0.0
        %1407 = vmatpush.msra.mxu0 0.0
        %1408 = vmatpush.msra.mxu0 0.0
        %1409 = vmatpush.msra.mxu0 0.0
        %1410 = vmatpush.msra.mxu0 0.0
        %1411 = vmatpush.msra.mxu0 0.0
        %1412 = vmatpush.msra.mxu0 0.0
        %1413 = vmatpush.msra.mxu0 0.0
        %1414 = vmatpush.msra.mxu0 0.0
        %1415 = vmatpush.msra.mxu0 %v1395
        %1416 = vmatmul.f32.gmra.mxu0 %v1398
        %v1417 = vpop.f32.mrf.mxu0
        %v1418 = vadd.f32 0.0, %v1417
        %1419 = vdwg.mxu0
        %1421 = vrot.lane.b32.xlu0 %v1418, 16
        %v1422 = vpop.permute.xlu0 %1421
        %v1424 = vsel %vm938, %v1351, %v1422
        %s1425 = scalar_lea.vmem %s7, 32
        %v1426 = vld [vmem:[%s1425] sm:$0xff]
        %v1427 = vld [vmem:[%s1425 + $0x8] sm:$0xff]
        %v1428 = vld [vmem:[%s1425 + $0x10] sm:$0xff]
        %v1429 = vld [vmem:[%s1425 + $0x18] sm:$0xff]
        %s1430 = scalar_lea.vmem %s8, 1
        %v1431 = vld [vmem:[%s1430] sm:$0x1]
        %v1433 = vperm.slane %v1431, 0
        %v1436 = vsel %vm866, %v1424, 0
        %1438 = vmatpush.msra.mxu0 0.0
        %1439 = vmatpush.msra.mxu0 0.0
        %1440 = vmatpush.msra.mxu0 0.0
        %1441 = vmatpush.msra.mxu0 0.0
        %1442 = vmatpush.msra.mxu0 0.0
        %1443 = vmatpush.msra.mxu0 0.0
        %1444 = vmatpush.msra.mxu0 0.0
        %1445 = vmatpush.msra.mxu0 0.0
        %1446 = vmatpush.msra.mxu0 0.0
        %1447 = vmatpush.msra.mxu0 0.0
        %1448 = vmatpush.msra.mxu0 0.0
        %1449 = vmatpush.msra.mxu0 0.0
        %1450 = vmatpush.msra.mxu0 %v1429
        %1451 = vmatpush.msra.mxu0 %v1428
        %1452 = vmatpush.msra.mxu0 %v1427
        %1453 = vmatpush.msra.mxu0 %v1426
        %1454 = vmatmul.f32.gmra.mxu0 %v1436
        %v1455 = vpop.f32.mrf.mxu0
        %v1456 = vadd.f32 %v1433, %v1455
        %1457 = vdwg.mxu0
        %v1458 = vadd.f32 %v1219, %v1456
        %s1459 = scalar_lea.vmem %s9, 1
        %v1460 = vld [vmem:[%s1459] sm:$0x1]
        %s1461 = scalar_lea.vmem %s10, 1
        %v1462 = vld [vmem:[%s1461] sm:$0x1]
        %v1463 = vsel %vm866, %v1458, 0.0
        %1464 = vadd.xlane.f32.xlu0 %v1463
        %v1465 = vpop.xlane.xlu0 %1464
        %v1466 = vmul.f32 %v1465, %v876
        %v1467 = vsub.f32 %v1458, %v1466
        %v1468 = vmul.f32 %v1467, %v1467
        %v1469 = vsel %vm866, %v1468, 0.0
        %1470 = vadd.xlane.f32.xlu0 %v1469
        %v1471 = vpop.xlane.xlu0 %1470
        %v1472 = vmul.f32 %v1471, %v876
        %v1473 = vadd.f32 %v1472, 1e-06
        %v1474 = vrsqrt.pop %v1473
        %v1475 = vmul.f32 %v1474, %v1473
        %v1476 = vmul.f32 %v1475, %v1474
        %v1477 = vmul.f32 0.5, %v1476
        %v1478 = vsub.f32 1.5, %v1477
        %v1479 = vmul.f32 %v1474, %v1478
        %vm1480 = vweird.f32 %v1473
        %vm1481 = vweird.f32 %v1474
        %vm1482 = vmor %vm1480, %vm1481
        %v1483 = vsel %vm1482, %v1474, %v1479
        %v1484 = vmul.f32 %v1467, %v1483
        %v1486 = vperm.slane %v1460, 0
        %v1488 = vmul.f32 %v1484, %v1486
        %v1490 = vperm.slane %v1462, 0
        %v1492 = vadd.f32 %v1488, %v1490
        %s1493 = scalar_lea.vmem %s11, 32
        %v1494 = vld [vmem:[%s1493] sm:$0xff]
        %v1495 = vld [vmem:[%s1493 + $0x8] sm:$0xff]
        %v1496 = vld [vmem:[%s1493 + $0x10] sm:$0xff]
        %v1497 = vld [vmem:[%s1493 + $0x18] sm:$0xff]
        %s1498 = scalar_lea.vmem %s12, 1
        %v1499 = vld [vmem:[%s1498] sm:$0x1]
        %v1501 = vperm.slane %v1499, 0
        %v1504 = vsel %vm866, %v1492, 0
        %1506 = vmatpush.msra.mxu0 0.0
        %1507 = vmatpush.msra.mxu0 0.0
        %1508 = vmatpush.msra.mxu0 0.0
        %1509 = vmatpush.msra.mxu0 0.0
        %1510 = vmatpush.msra.mxu0 0.0
        %1511 = vmatpush.msra.mxu0 0.0
        %1512 = vmatpush.msra.mxu0 0.0
        %1513 = vmatpush.msra.mxu0 0.0
        %1514 = vmatpush.msra.mxu0 0.0
        %1515 = vmatpush.msra.mxu0 0.0
        %1516 = vmatpush.msra.mxu0 0.0
        %1517 = vmatpush.msra.mxu0 0.0
        %1518 = vmatpush.msra.mxu0 %v1497
        %1519 = vmatpush.msra.mxu0 %v1496
        %1520 = vmatpush.msra.mxu0 %v1495
        %1521 = vmatpush.msra.mxu0 %v1494
        %1522 = vmatmul.f32.gmra.mxu0 %v1504
        %v1523 = vpop.f32.mrf.mxu0
        %v1524 = vadd.f32 %v1501, %v1523
        %1525 = vdwg.mxu0
        %v1526 = vmul.f32 %v1524, %v1524
        %v1527 = vmul.f32 %v1524, %v1526
        %v1528 = vmul.f32 %v1527, 0.044715
        %v1529 = vadd.f32 %v1524, %v1528
        %v1530 = vmul.f32 %v1529, 0.7978846
        %v1531 = vtanh.pop %v1530
        %v1532 = vadd.f32 %v1531, 1.0
        %v1533 = vmul.f32 %v1532, 0.5
        %v1534 = vmul.f32 %v1524, %v1533
        %s1535 = scalar_lea.vmem %s13, 128
        %v1536 = vld [vmem:[%s1535] sm:$0xff]
        %v1537 = vld [vmem:[%s1535 + $0x8] sm:$0xff]
        %v1538 = vld [vmem:[%s1535 + $0x10] sm:$0xff]
        %v1539 = vld [vmem:[%s1535 + $0x18] sm:$0xff]
        %v1540 = vld [vmem:[%s1535 + $0x20] sm:$0xff]
        %v1541 = vld [vmem:[%s1535 + $0x28] sm:$0xff]
        %v1542 = vld [vmem:[%s1535 + $0x30] sm:$0xff]
        %v1543 = vld [vmem:[%s1535 + $0x38] sm:$0xff]
        %v1544 = vld [vmem:[%s1535 + $0x40] sm:$0xff]
        %v1545 = vld [vmem:[%s1535 + $0x48] sm:$0xff]
        %v1546 = vld [vmem:[%s1535 + $0x50] sm:$0xff]
        %v1547 = vld [vmem:[%s1535 + $0x58] sm:$0xff]
        %v1548 = vld [vmem:[%s1535 + $0x60] sm:$0xff]
        %v1549 = vld [vmem:[%s1535 + $0x68] sm:$0xff]
        %v1550 = vld [vmem:[%s1535 + $0x70] sm:$0xff]
        %v1551 = vld [vmem:[%s1535 + $0x78] sm:$0xff]
        %s1552 = scalar_lea.vmem %s14, 1
        %v1553 = vld [vmem:[%s1552] sm:$0x1]
        %v1555 = vperm.slane %v1553, 0
        %1557 = vmatpush.msra.mxu0 %v1551
        %1558 = vmatpush.msra.mxu0 %v1550
        %1559 = vmatpush.msra.mxu0 %v1549
        %1560 = vmatpush.msra.mxu0 %v1548
        %1561 = vmatpush.msra.mxu0 %v1547
        %1562 = vmatpush.msra.mxu0 %v1546
        %1563 = vmatpush.msra.mxu0 %v1545
        %1564 = vmatpush.msra.mxu0 %v1544
        %1565 = vmatpush.msra.mxu0 %v1543
        %1566 = vmatpush.msra.mxu0 %v1542
        %1567 = vmatpush.msra.mxu0 %v1541
        %1568 = vmatpush.msra.mxu0 %v1540
        %1569 = vmatpush.msra.mxu0 %v1539
        %1570 = vmatpush.msra.mxu0 %v1538
        %1571 = vmatpush.msra.mxu0 %v1537
        %1572 = vmatpush.msra.mxu0 %v1536
        %1573 = vmatmul.f32.gmra.mxu0 %v1534
        %v1574 = vpop.f32.mrf.mxu0
        %v1575 = vadd.f32 %v1555, %v1574
        %1576 = vdwg.mxu0
        %v1577 = vadd.f32 %v1458, %v1575
        %v1578 = vld [vmem:[%s15] sm:$0x1]
        %v1579 = vld [vmem:[%s16] sm:$0x1]
        %v1580 = vsel %vm866, %v1577, 0.0
        %1581 = vadd.xlane.f32.xlu0 %v1580
        %v1582 = vpop.xlane.xlu0 %1581
        %v1583 = vmul.f32 %v1582, %v876
        %v1584 = vsub.f32 %v1577, %v1583
        %v1585 = vmul.f32 %v1584, %v1584
        %v1586 = vsel %vm866, %v1585, 0.0
        %1587 = vadd.xlane.f32.xlu0 %v1586
        %v1588 = vpop.xlane.xlu0 %1587
        %v1589 = vmul.f32 %v1588, %v876
        %v1590 = vadd.f32 %v1589, 1e-06
        %v1591 = vrsqrt.pop %v1590
        %v1592 = vmul.f32 %v1591, %v1590
        %v1593 = vmul.f32 %v1592, %v1591
        %v1594 = vmul.f32 0.5, %v1593
        %v1595 = vsub.f32 1.5, %v1594
        %v1596 = vmul.f32 %v1591, %v1595
        %vm1597 = vweird.f32 %v1590
        %vm1598 = vweird.f32 %v1591
        %vm1599 = vmor %vm1597, %vm1598
        %v1600 = vsel %vm1599, %v1591, %v1596
        %v1601 = vmul.f32 %v1584, %v1600
        %v1603 = vperm.slane %v1578, 0
        %v1605 = vmul.f32 %v1601, %v1603
        %v1607 = vperm.slane %v1579, 0
        %v1609 = vadd.f32 %v1605, %v1607
        %vm1610 = vcmask 253952
        %1611 = vst.msk [vmem:[%s625] sm:$0x1] %vm1610, %v1609
        %v1612 = vld [vmem:[%s17] sm:$0xff]
        %v1613 = vld [vmem:[%s17 + $0x8] sm:$0xff]
        %v1614 = vld [vmem:[%s17 + $0x10] sm:$0xff]
        %v1615 = vld [vmem:[%s17 + $0x18] sm:$0xff]
        %v1616 = vld [vmem:[%s18] sm:$0x1]
        %v1618 = vsel %vm866, %v1609, 0
        %1620 = vmatpush.msra.mxu0 0.0
        %1621 = vmatpush.msra.mxu0 0.0
        %1622 = vmatpush.msra.mxu0 0.0
        %1623 = vmatpush.msra.mxu0 0.0
        %1624 = vmatpush.msra.mxu0 0.0
        %1625 = vmatpush.msra.mxu0 0.0
        %1626 = vmatpush.msra.mxu0 0.0
        %1627 = vmatpush.msra.mxu0 0.0
        %1628 = vmatpush.msra.mxu0 0.0
        %1629 = vmatpush.msra.mxu0 0.0
        %1630 = vmatpush.msra.mxu0 0.0
        %1631 = vmatpush.msra.mxu0 0.0
        %1632 = vmatpush.msra.mxu0 %v1615
        %1633 = vmatpush.msra.mxu0 %v1614
        %1634 = vmatpush.msra.mxu0 %v1613
        %1635 = vmatpush.msra.mxu0 %v1612
        %1636 = vmatmul.f32.gmra.mxu0 %v1618
        %v1637 = vpop.f32.mrf.mxu0
        %v1638 = vadd.f32 %v1616, %v1637
        %1639 = vdwg.mxu0
        %vm1640 = vcmask 73728
        %1641 = vst.msk [vmem:[%s631] sm:$0x1] %vm1640, %v1638
        %s1642 = sand.u32 %s450, 1
        %s1643 = scalar_lea.sflag [#allocation3], %s1642
        %s1644 = sand.u32 %s450, 1
        %s1645 = scalar_lea.vmem [#allocation2], %s1644
        %s1646 = sand.u32 %s476, 1
        %s1647 = scalar_lea.sflag [#allocation5], %s1646
        %s1648 = sand.u32 %s476, 1
        %s1649 = scalar_lea.vmem [#allocation4], %s1648
        // Predicated region
        $region97: #{vit_zoo_forward.1} parent=95 // pred_check
          %p1650 = pneg %p460
        $region98: #{vit_zoo_forward.1} parent=95 // pred_check_branch
          %1652 = sbr.rel (%p1650) target = $region100
        $region99: #{vit_zoo_forward.1} parent=95 // pred_region
          %1654 = vsyncadd %s1643, 0
          %s1655 = scalar_lea.hbm %s19, %s38
          %s1657 = sshll.u32 %s1645, 4
          %s1658 = int_to_ptr.vmem [resolvable:$true] %s1657
          %s1659 = sshll.u32 %s1655, 4
          %s1660 = int_to_ptr.hbm [resolvable:$true] %s1659
          %1662 = dma.vmem_to_hbm [thread:$0]  %s1658, 16, %s1660, %s1643
        $region100: #{vit_zoo_forward.1} parent=95 // pred_fallthru
          _
        // Predicated region
        $region101: #{vit_zoo_forward.1} parent=95 // pred_check
          %p1663 = pneg %p486
        $region102: #{vit_zoo_forward.1} parent=95 // pred_check_branch
          %1665 = sbr.rel (%p1663) target = $region104
        $region103: #{vit_zoo_forward.1} parent=95 // pred_region
          %1667 = vsyncadd %s1647, 0
          %s1668 = scalar_lea.hbm %s20, %s38
          %s1670 = sshll.u32 %s1649, 4
          %s1671 = int_to_ptr.vmem [resolvable:$true] %s1670
          %s1672 = sshll.u32 %s1668, 4
          %s1673 = int_to_ptr.hbm [resolvable:$true] %s1672
          %1675 = dma.vmem_to_hbm [thread:$0]  %s1671, 16, %s1673, %s1647
        $region104: #{vit_zoo_forward.1} parent=95 // pred_fallthru
          _
      $region96: #{vit_zoo_forward.1} parent=5 // pred_fallthru
        _
      %p1676 = scmp.le.s32.totalorder 2, %s33
      // Predicated region
      $region105: #{vit_zoo_forward.1} parent=5 // pred_check
        %p1677 = pneg %p1676
      $region106: #{vit_zoo_forward.1} parent=5 // pred_check_branch
        %1679 = sbr.rel (%p1677) target = $region108
      $region107: #{vit_zoo_forward.1} parent=5 // pred_region
        %s1680 = ssub.s32 %s33, 2
        // Predicated region
        $region109: #{vit_zoo_forward.1} parent=107 // pred_check
          %p1681 = pneg %p466
        $region110: #{vit_zoo_forward.1} parent=107 // pred_check_branch
          %1683 = sbr.rel (%p1681) target = $region112
        $region111: #{vit_zoo_forward.1} parent=107 // pred_region
          %s1684 = sand.u32 %s451, 1
          %s1685 = scalar_lea.sflag [#allocation3], %s1684
          %s1686 = sand.u32 %s451, 1
          %s1687 = scalar_lea.vmem [#allocation2], %s1686
          %1689 = dma.done %s1685, 16
        $region112: #{vit_zoo_forward.1} parent=107 // pred_fallthru
          _
        // Predicated region
        $region113: #{vit_zoo_forward.1} parent=107 // pred_check
          %p1690 = pneg %p492
        $region114: #{vit_zoo_forward.1} parent=107 // pred_check_branch
          %1692 = sbr.rel (%p1690) target = $region116
        $region115: #{vit_zoo_forward.1} parent=107 // pred_region
          %s1693 = sand.u32 %s477, 1
          %s1694 = scalar_lea.sflag [#allocation5], %s1693
          %s1695 = sand.u32 %s477, 1
          %s1696 = scalar_lea.vmem [#allocation4], %s1695
          %1698 = dma.done %s1694, 16
        $region116: #{vit_zoo_forward.1} parent=107 // pred_fallthru
          _
      $region108: #{vit_zoo_forward.1} parent=5 // pred_fallthru
        _
    $region6: #{vit_zoo_forward.1} parent=1 // loop_footer
      %s37 = sadd.s32 1, %s33
    $region7: #{vit_zoo_forward.1} parent=1 // loop_footer_branch
      %32 = sbr.rel target = $region3
    $region8: #{vit_zoo_forward.1} parent=1 // loop_exit
      _
    %1699 = vsyncpa [#allocation3], 1
    %s1700 = scalar_lea.sflag [#allocation3], 1
    %1701 = vsyncpa %s1700, 1
    %1702 = vsyncpa [#allocation5], 1
    %s1703 = scalar_lea.sflag [#allocation5], 1
    %1704 = vsyncpa %s1703, 1

</llo_original>
